<compile_context>
chip_gen: v7x
topology: tpu7x:2x2x1
jax: 0.10.0
libtpu: 0.0.40
codegen_flags: <defaults>
</compile_context>

<pallas_src>
from functools import lru_cache

import numpy as np
import jax
import jax.numpy as jnp
from jax import lax
from jax.experimental import pallas as pl
from jax.experimental.pallas import tpu as pltpu


# --------------------------- hardware-aware sizing ---------------------------

@lru_cache(maxsize=None)
def _vmem_limit_bytes():
    """Generation-aware scoped-VMEM limit: ~85% of physical, capped at 112 MiB."""
    cap = 64 * 1024 * 1024  # conservative fallback (v7x physical size)
    try:
        cap = int(pltpu.get_tpu_info().vmem_capacity_bytes)
    except Exception:
        pass
    return int(min(cap * 0.85, 112 * 1024 * 1024))


def _pick_tile(n, max_tile, quantum):
    """Largest divisor of n that is a multiple of `quantum` and <= max_tile; else n."""
    t = (min(max_tile, n) // quantum) * quantum
    while t >= quantum:
        if n % t == 0:
            return t
        t -= quantum
    return n
    # TODO(synk): a cdiv grid with a masked tail would keep large tiles for awkward N.


# ----------------------------- Pallas kernels ------------------------------

def _patch_embed_kernel(x_ref, w_ref, b_ref, pos_ref, o_ref):
    # x: (1, tm, K) bf16, w: (K, D) bf16 (pre-transposed), b: (1, D) f32,
    # pos: (1, tm, D) bf16, o: (1, tm, D) bf16
    acc = jnp.dot(x_ref[0], w_ref[...], preferred_element_type=jnp.float32)
    o_ref[0] = (acc + b_ref[...] + pos_ref[0].astype(jnp.float32)).astype(o_ref.dtype)


def patch_embed(patches, w_patch_t, b_patch, pos_embed):
    # patches: (B, N, K) bf16 -> tokens (B, N, D) bf16 with bias + pos_embed fused.
    B, N, K = patches.shape
    D = w_patch_t.shape[1]
    vlim = _vmem_limit_bytes()
    # double-buffered streaming blocks per token row: x (bf16) + pos (bf16) + out (bf16)
    row_bytes = 2 * (K * 2 + D * 2 + D * 2)
    resident = 2 * (K * D * 2 + D * 4)            # weight + bias (Pallas double-buffers)
    budget = max(int(vlim * 0.6) - resident, 8 * row_bytes)
    max_tm = max(8, min(1024, budget // row_bytes))
    tm = _pick_tile(N, max_tm, quantum=8)
    return pl.pallas_call(
        _patch_embed_kernel,
        out_shape=jax.ShapeDtypeStruct((B, N, D), jnp.bfloat16),
        grid=(B, N // tm),
        in_specs=[
            pl.BlockSpec((1, tm, K), lambda b, m: (b, m, 0)),
            pl.BlockSpec((K, D), lambda b, m: (0, 0)),       # weight resident in VMEM
            pl.BlockSpec((1, D), lambda b, m: (0, 0)),
            pl.BlockSpec((1, tm, D), lambda b, m: (0, m, 0)),
        ],
        out_specs=pl.BlockSpec((1, tm, D), lambda b, m: (b, m, 0)),
        compiler_params=pltpu.CompilerParams(
            dimension_semantics=("parallel", "parallel"),
            vmem_limit_bytes=vlim),
    )(patches.astype(jnp.bfloat16), w_patch_t.astype(jnp.bfloat16),
      b_patch.reshape(1, D).astype(jnp.float32), pos_embed.astype(jnp.bfloat16))


def _head_kernel(x_ref, wt_ref, b_ref, o_ref):
    # x: (1, tn, D) bf16, wt: (C, D) bf16 (PyTorch Linear layout), b: (C, 1) f32,
    # o: (1, C, tn) f32 -- channel-major output, so no XLA transpose is needed later.
    st = lax.dot_general(
        wt_ref[...], x_ref[0],
        dimension_numbers=(((1,), (1,)), ((), ())),          # (C,D) x (tn,D)^T -> (C, tn)
        preferred_element_type=jnp.float32)
    o_ref[0] = (st + b_ref[...]).astype(o_ref.dtype)


def linear_head(tok, w_head, b_head):
    # tok: (B, N, D) bf16 -> logits, channel-major (B, C, N) f32, tiled over tokens.
    B, N, D = tok.shape
    C = w_head.shape[0]
    tn = _pick_tile(N, 512, quantum=128)                      # lane-dense stores when possible
    return pl.pallas_call(
        _head_kernel,
        out_shape=jax.ShapeDtypeStruct((B, C, N), jnp.float32),
        grid=(B, N // tn),
        in_specs=[
            pl.BlockSpec((1, tn, D), lambda b, m: (b, m, 0)),
            pl.BlockSpec((C, D), lambda b, m: (0, 0)),
            pl.BlockSpec((C, 1), lambda b, m: (0, 0)),
        ],
        out_specs=pl.BlockSpec((1, C, tn), lambda b, m: (b, 0, m)),
        compiler_params=pltpu.CompilerParams(
            dimension_semantics=("parallel", "parallel"),
            vmem_limit_bytes=_vmem_limit_bytes()),
    )(tok, w_head.astype(jnp.bfloat16), b_head.reshape(C, 1).astype(jnp.float32))


def _upsample_kernel(m_ref, wh_ref, wwt_ref, o_ref):
    # m: (tc, gh, gw) f32, wh: (H_out, gh) f32, wwt: (gw, W_out) f32,
    # o: (tc, H_out, W_out) f32  -- H_out/W_out are the UNPADDED sizes (crop fused).
    wh = wh_ref[...]
    wwt = wwt_ref[...]

    def body(c, carry):
        t = jnp.dot(m_ref[c], wwt, preferred_element_type=jnp.float32)   # (gh, W_out)
        o_ref[c] = jnp.dot(wh, t, preferred_element_type=jnp.float32)    # lane-dense W_out
        return carry

    lax.fori_loop(0, m_ref.shape[0], body, 0, unroll=True)


def bilinear_upsample_crop(m, wh, wwt):
    # m: (BC, gh, gw) -> (BC, H_out, W_out); interp matrices are already cropped to the
    # unpadded output size, so the unpad slice is fused into this kernel's store.
    BC, gh, gw = m.shape
    H_out = wh.shape[0]
    W_out = wwt.shape[1]
    vlim = _vmem_limit_bytes()
    per_ch = 4 * (H_out * W_out + gh * gw)                    # f32 out + in, per channel
    mats = 2 * 4 * (H_out * gh + gw * W_out)                  # resident interp matrices
    budget = max(int(vlim * 0.45) - mats, 2 * per_ch)
    max_tc = max(1, min(16, budget // (2 * per_ch)))          # double-buffered in + out
    if BC >= 2:
        max_tc = min(max_tc, BC // 2)                         # >=2 grid steps (megacore)
    tc = _pick_tile(BC, max_tc, quantum=1)
    return pl.pallas_call(
        _upsample_kernel,
        out_shape=jax.ShapeDtypeStruct((BC, H_out, W_out), jnp.float32),
        grid=(BC // tc,),
        in_specs=[
            pl.BlockSpec((tc, gh, gw), lambda i: (i, 0, 0)),
            pl.BlockSpec((H_out, gh), lambda i: (0, 0)),
            pl.BlockSpec((gw, W_out), lambda i: (0, 0)),
        ],
        out_specs=pl.BlockSpec((tc, H_out, W_out), lambda i: (i, 0, 0)),
        compiler_params=pltpu.CompilerParams(
            dimension_semantics=("parallel",),
            vmem_limit_bytes=vlim),
    )(m.astype(jnp.float32), wh.astype(jnp.float32), wwt.astype(jnp.float32))


# ------------------------------- host-side glue -----------------------------

@lru_cache(maxsize=None)
def _bilinear_row_matrix(in_size, out_size):
    """(out, in) matrix matching torch F.interpolate(mode='bilinear', align_corners=False)."""
    m = np.zeros((out_size, in_size), dtype=np.float32)
    scale = in_size / out_size
    for i in range(out_size):
        src = max(0.0, (i + 0.5) * scale - 0.5)
        x0 = min(int(np.floor(src)), in_size - 1)
        x1 = min(x0 + 1, in_size - 1)
        lam = src - x0
        m[i, x0] += 1.0 - lam
        m[i, x1] += lam
    return m


def extract_patches(im, P):
    # im: (B, C, H, W) -> (B, N, C*P*P), patch flattened in (c, p, q) order
    B, C, H, W = im.shape
    gh, gw = H // P, W // P
    x = im.reshape(B, C, gh, P, gw, P)
    x = x.transpose(0, 2, 4, 1, 3, 5)              # (B, gh, gw, C, P, P)
    return x.reshape(B, gh * gw, C * P * P)


def segmenter_forward(im, params, patch_size, n_cls):
    B, C, H_ori, W_ori = im.shape

    # --- padding(im, patch_size); image cast to bf16 up front to halve im2col HBM traffic.
    pad_h = (-H_ori) % patch_size
    pad_w = (-W_ori) % patch_size
    im_p = jnp.pad(im.astype(jnp.bfloat16), ((0, 0), (0, 0), (0, pad_h), (0, pad_w)))
    H, W = H_ori + pad_h, W_ori + pad_w
    gh, gw = H // patch_size, W // patch_size
    N = gh * gw

    # --- encoder(im, return_features=True): patch embed with fused bias + pos embed.
    #     cls-token concat followed by x[:, num_extra_tokens:] is a semantic no-op for this
    #     blockless encoder, so it is skipped (two fewer HBM passes over the tokens).
    # TODO(synk): fusing the im2col into the patch-embed kernel would save one more image pass.
    patches = extract_patches(im_p, patch_size)                          # (B, N, C*P*P) bf16
    w_patch_t = params["w_patch"].T                                      # (K, D), one-time
    tok = patch_embed(patches, w_patch_t, params["b_patch"],
                      params["pos_embed"])                               # (B, N, D) bf16

    # --- decoder (linear) head, written channel-major (B, n_cls, N) by the kernel ---
    logits_t = linear_head(tok, params["w_head"], params["b_head"])      # (B, n_cls, N) f32

    # --- F.interpolate(masks, (H, W), bilinear) + unpadding, fused:
    #     padding is bottom/right only, so cropping the interpolation matrices to the
    #     first H_ori rows / W_ori cols is exactly equivalent to interpolate-then-crop.
    wh = jnp.asarray(np.ascontiguousarray(_bilinear_row_matrix(gh, H)[:H_ori]))        # (H_ori, gh)
    wwt = jnp.asarray(np.ascontiguousarray(_bilinear_row_matrix(gw, W).T[:, :W_ori]))  # (gw, W_ori)
    masks = logits_t.reshape(B * n_cls, gh, gw)                          # free reshape
    up = bilinear_upsample_crop(masks, wh, wwt)                          # (B*n_cls, H_ori, W_ori)
    return up.reshape(B, n_cls, H_ori, W_ori)


# --------------------------------- main --------------------------------------

if __name__ == "__main__":
    B, C = 2, 4
    H_ori, W_ori = 13, 13            # not a multiple of patch_size -> exercises pad/unpad fusion
    patch_size = 8
    D = 32
    n_cls = 5

    H_pad = H_ori + (-H_ori) % patch_size
    W_pad = W_ori + (-W_ori) % patch_size
    N = (H_pad // patch_size) * (W_pad // patch_size)

    key = jax.random.PRNGKey(0)
    k_im, k_wp, k_bp, k_pos, k_cls, k_wh, k_bh = jax.random.split(key, 7)

    im = jax.random.normal(k_im, (B, C, H_ori, W_ori), dtype=jnp.float32)

    params = {
        # Conv2d(kernel=stride=patch) weight flattened to (D, C*P*P) -- PyTorch layout.
        "w_patch": 0.02 * jax.random.normal(k_wp, (D, C * patch_size * patch_size), jnp.float32),
        "b_patch": 0.01 * jax.random.normal(k_bp, (D,), jnp.float32),
        "pos_embed": 0.02 * jax.random.normal(k_pos, (1, N, D), jnp.float32),
        # cls_token exists in the encoder but Segmenter drops it (num_extra_tokens=1) -> unused.
        "cls_token": 0.02 * jax.random.normal(k_cls, (1, 1, D), jnp.float32),
        # nn.Linear weight layout (out_features, in_features) = (n_cls, D).
        "w_head": 0.02 * jax.random.normal(k_wh, (n_cls, D), jnp.float32),
        "b_head": 0.01 * jax.random.normal(k_bh, (n_cls,), jnp.float32),
    }

    fwd = jax.jit(segmenter_forward, static_argnums=(2, 3))
    masks = fwd(im, params, patch_size, n_cls)
    masks = jax.block_until_ready(masks)
    assert masks.shape == (B, n_cls, H_ori, W_ori), masks.shape
    assert masks.dtype == jnp.float32
    print("KERNEL_OK")
</pallas_src>

<mosaic_0001>
module attributes {stable_mosaic.version = 11 : i64} {
  func.func @_patch_embed_kernel(%arg0: i32, %arg1: i32, %arg2: memref<1x4x256xbf16, #tpu.memory_space<vmem>>, %arg3: memref<256x32xbf16, #tpu.memory_space<vmem>>, %arg4: memref<1x32xf32, #tpu.memory_space<vmem>>, %arg5: memref<1x4x32xbf16, #tpu.memory_space<vmem>>, %arg6: memref<1x4x32xbf16, #tpu.memory_space<vmem>>) attributes {dimension_semantics = [#tpu.dimension_semantics<parallel>, #tpu.dimension_semantics<parallel>], iteration_bounds = array<i64: 2, 1>, scalar_prefetch = 0 : i64, scratch_operands = 0 : i64, tpu.core_type = #tpu.core_type<tc>, window_params = [{transform_indices = @transform_0, window_bounds = array<i64: 1, 4, 256>}, {pipeline_mode = #tpu.pipeline_mode<synchronous>, transform_indices = @transform_1, window_bounds = array<i64: 256, 32>}, {pipeline_mode = #tpu.pipeline_mode<synchronous>, transform_indices = @transform_2, window_bounds = array<i64: 1, 32>}, {transform_indices = @transform_3, window_bounds = array<i64: 1, 4, 32>}, {transform_indices = @transform_4, window_bounds = array<i64: 1, 4, 32>}]} {
    %c0 = arith.constant 0 : index
    %c0_0 = arith.constant 0 : index
    %c0_1 = arith.constant 0 : index
    %0 = vector.load %arg2[%c0, %c0_0, %c0_1] : memref<1x4x256xbf16, #tpu.memory_space<vmem>>, vector<1x4x256xbf16>
    %1 = vector.shape_cast %0 : vector<1x4x256xbf16> to vector<4x256xbf16>
    %c0_2 = arith.constant 0 : index
    %c0_3 = arith.constant 0 : index
    %2 = vector.load %arg3[%c0_2, %c0_3] : memref<256x32xbf16, #tpu.memory_space<vmem>>, vector<256x32xbf16>
    %cst = arith.constant dense<0.000000e+00> : vector<4x32xf32>
    %3 = tpu.matmul %1, %2, %cst {dimension_numbers = #tpu.dot_dimension_numbers<[1], [0], [0], [1], [0, 0, 1, 1], [], []>} : vector<4x256xbf16>, vector<256x32xbf16>, vector<4x32xf32> -> vector<4x32xf32>
    %c0_4 = arith.constant 0 : index
    %c0_5 = arith.constant 0 : index
    %4 = vector.load %arg4[%c0_4, %c0_5] : memref<1x32xf32, #tpu.memory_space<vmem>>, vector<1x32xf32>
    %5 = vector.broadcast %4 : vector<1x32xf32> to vector<4x32xf32>
    %6 = arith.addf %3, %5 : vector<4x32xf32>
    %c0_6 = arith.constant 0 : index
    %c0_7 = arith.constant 0 : index
    %c0_8 = arith.constant 0 : index
    %7 = vector.load %arg5[%c0_6, %c0_7, %c0_8] : memref<1x4x32xbf16, #tpu.memory_space<vmem>>, vector<1x4x32xbf16>
    %8 = vector.shape_cast %7 : vector<1x4x32xbf16> to vector<4x32xbf16>
    %9 = arith.extf %8 : vector<4x32xbf16> to vector<4x32xf32>
    %10 = arith.addf %6, %9 : vector<4x32xf32>
    %11 = arith.truncf %10 : vector<4x32xf32> to vector<4x32xbf16>
    %c0_9 = arith.constant 0 : index
    %c0_10 = arith.constant 0 : index
    %c0_11 = arith.constant 0 : index
    %12 = vector.load %arg6[%c0_9, %c0_10, %c0_11] : memref<1x4x32xbf16, #tpu.memory_space<vmem>>, vector<1x4x32xbf16>
    %13 = vector.shape_cast %12 : vector<1x4x32xbf16> to vector<4x32xbf16>
    %14 = vector.shape_cast %11 : vector<4x32xbf16> to vector<1x4x32xbf16>
    tpu.vector_store %arg6[%c0_9, %c0_10, %c0_11], %14 {strides = array<i32>} : memref<1x4x32xbf16, #tpu.memory_space<vmem>>, vector<1x4x32xbf16>,
    return
  }
  func.func @transform_0(%arg0: i32, %arg1: i32) -> (i32, i32, i32) {
    %c0_i32 = arith.constant 0 : i32
    %c0_i32_0 = arith.constant 0 : i32
    return %arg0, %arg1, %c0_i32 : i32, i32, i32
  }
  func.func @transform_1(%arg0: i32, %arg1: i32) -> (i32, i32) {
    %c0_i32 = arith.constant 0 : i32
    %c0_i32_0 = arith.constant 0 : i32
    %c0_i32_1 = arith.constant 0 : i32
    return %c0_i32, %c0_i32_0 : i32, i32
  }
  func.func @transform_2(%arg0: i32, %arg1: i32) -> (i32, i32) {
    %c0_i32 = arith.constant 0 : i32
    %c0_i32_0 = arith.constant 0 : i32
    %c0_i32_1 = arith.constant 0 : i32
    return %c0_i32, %c0_i32_0 : i32, i32
  }
  func.func @transform_3(%arg0: i32, %arg1: i32) -> (i32, i32, i32) {
    %c0_i32 = arith.constant 0 : i32
    %c0_i32_0 = arith.constant 0 : i32
    %c0_i32_1 = arith.constant 0 : i32
    return %c0_i32, %arg1, %c0_i32_0 : i32, i32, i32
  }
  func.func @transform_4(%arg0: i32, %arg1: i32) -> (i32, i32, i32) {
    %c0_i32 = arith.constant 0 : i32
    %c0_i32_0 = arith.constant 0 : i32
    return %arg0, %arg1, %c0_i32 : i32, i32, i32
  }
}

module attributes {stable_mosaic.version = 11 : i64} {
  func.func @_upsample_kernel(%arg0: i32, %arg1: memref<5x2x2xf32, #tpu.memory_space<vmem>>, %arg2: memref<13x2xf32, #tpu.memory_space<vmem>>, %arg3: memref<2x13xf32, #tpu.memory_space<vmem>>, %arg4: memref<5x13x13xf32, #tpu.memory_space<vmem>>) attributes {dimension_semantics = [#tpu.dimension_semantics<parallel>], iteration_bounds = array<i64: 2>, scalar_prefetch = 0 : i64, scratch_operands = 0 : i64, tpu.core_type = #tpu.core_type<tc>, window_params = [{transform_indices = @transform_0, window_bounds = array<i64: 5, 2, 2>}, {pipeline_mode = #tpu.pipeline_mode<synchronous>, transform_indices = @transform_1, window_bounds = array<i64: 13, 2>}, {pipeline_mode = #tpu.pipeline_mode<synchronous>, transform_indices = @transform_2, window_bounds = array<i64: 2, 13>}, {transform_indices = @transform_3, window_bounds = array<i64: 5, 13, 13>}]} {
    %c0 = arith.constant 0 : index
    %c0_0 = arith.constant 0 : index
    %0 = vector.load %arg2[%c0, %c0_0] : memref<13x2xf32, #tpu.memory_space<vmem>>, vector<13x2xf32>
    %c0_1 = arith.constant 0 : index
    %c0_2 = arith.constant 0 : index
    %1 = vector.load %arg3[%c0_1, %c0_2] : memref<2x13xf32, #tpu.memory_space<vmem>>, vector<2x13xf32>
    %c0_i32 = arith.constant 0 : i32
    %2 = arith.index_cast %c0_i32 : i32 to index
    %c0_3 = arith.constant 0 : index
    %c0_4 = arith.constant 0 : index
    %3 = vector.load %arg1[%2, %c0_3, %c0_4] : memref<5x2x2xf32, #tpu.memory_space<vmem>>, vector<1x2x2xf32>
    %4 = vector.shape_cast %3 : vector<1x2x2xf32> to vector<2x2xf32>
    %cst = arith.constant dense<0.000000e+00> : vector<2x13xf32>
    %5 = tpu.matmul %4, %1, %cst {dimension_numbers = #tpu.dot_dimension_numbers<[1], [0], [0], [1], [0, 0, 1, 1], [], []>} : vector<2x2xf32>, vector<2x13xf32>, vector<2x13xf32> -> vector<2x13xf32>
    %cst_5 = arith.constant dense<0.000000e+00> : vector<13x13xf32>
    %6 = tpu.matmul %0, %5, %cst_5 {dimension_numbers = #tpu.dot_dimension_numbers<[1], [0], [0], [1], [0, 0, 1, 1], [], []>} : vector<13x2xf32>, vector<2x13xf32>, vector<13x13xf32> -> vector<13x13xf32>
    %7 = arith.index_cast %c0_i32 : i32 to index
    %c0_6 = arith.constant 0 : index
    %c0_7 = arith.constant 0 : index
    %8 = vector.load %arg4[%7, %c0_6, %c0_7] : memref<5x13x13xf32, #tpu.memory_space<vmem>>, vector<1x13x13xf32>
    %9 = vector.shape_cast %8 : vector<1x13x13xf32> to vector<13x13xf32>
    %10 = vector.shape_cast %6 : vector<13x13xf32> to vector<1x13x13xf32>
    tpu.vector_store %arg4[%7, %c0_6, %c0_7], %10 {strides = array<i32>} : memref<5x13x13xf32, #tpu.memory_space<vmem>>, vector<1x13x13xf32>,
    %c1_i32 = arith.constant 1 : i32
    %11 = arith.index_cast %c1_i32 : i32 to index
    %c0_8 = arith.constant 0 : index
    %c0_9 = arith.constant 0 : index
    %12 = vector.load %arg1[%11, %c0_8, %c0_9] : memref<5x2x2xf32, #tpu.memory_space<vmem>>, vector<1x2x2xf32>
    %13 = vector.shape_cast %12 : vector<1x2x2xf32> to vector<2x2xf32>
    %cst_10 = arith.constant dense<0.000000e+00> : vector<2x13xf32>
    %14 = tpu.matmul %13, %1, %cst_10 {dimension_numbers = #tpu.dot_dimension_numbers<[1], [0], [0], [1], [0, 0, 1, 1], [], []>} : vector<2x2xf32>, vector<2x13xf32>, vector<2x13xf32> -> vector<2x13xf32>
    %cst_11 = arith.constant dense<0.000000e+00> : vector<13x13xf32>
    %15 = tpu.matmul %0, %14, %cst_11 {dimension_numbers = #tpu.dot_dimension_numbers<[1], [0], [0], [1], [0, 0, 1, 1], [], []>} : vector<13x2xf32>, vector<2x13xf32>, vector<13x13xf32> -> vector<13x13xf32>
    %16 = arith.index_cast %c1_i32 : i32 to index
    %c0_12 = arith.constant 0 : index
    %c0_13 = arith.constant 0 : index
    %17 = vector.load %arg4[%16, %c0_12, %c0_13] : memref<5x13x13xf32, #tpu.memory_space<vmem>>, vector<1x13x13xf32>
    %18 = vector.shape_cast %17 : vector<1x13x13xf32> to vector<13x13xf32>
    %19 = vector.shape_cast %15 : vector<13x13xf32> to vector<1x13x13xf32>
    tpu.vector_store %arg4[%16, %c0_12, %c0_13], %19 {strides = array<i32>} : memref<5x13x13xf32, #tpu.memory_space<vmem>>, vector<1x13x13xf32>,
    %c2_i32 = arith.constant 2 : i32
    %20 = arith.index_cast %c2_i32 : i32 to index
    %c0_14 = arith.constant 0 : index
    %c0_15 = arith.constant 0 : index
    %21 = vector.load %arg1[%20, %c0_14, %c0_15] : memref<5x2x2xf32, #tpu.memory_space<vmem>>, vector<1x2x2xf32>
    %22 = vector.shape_cast %21 : vector<1x2x2xf32> to vector<2x2xf32>
    %cst_16 = arith.constant dense<0.000000e+00> : vector<2x13xf32>
    %23 = tpu.matmul %22, %1, %cst_16 {dimension_numbers = #tpu.dot_dimension_numbers<[1], [0], [0], [1], [0, 0, 1, 1], [], []>} : vector<2x2xf32>, vector<2x13xf32>, vector<2x13xf32> -> vector<2x13xf32>
    %cst_17 = arith.constant dense<0.000000e+00> : vector<13x13xf32>
    %24 = tpu.matmul %0, %23, %cst_17 {dimension_numbers = #tpu.dot_dimension_numbers<[1], [0], [0], [1], [0, 0, 1, 1], [], []>} : vector<13x2xf32>, vector<2x13xf32>, vector<13x13xf32> -> vector<13x13xf32>
    %25 = arith.index_cast %c2_i32 : i32 to index
    %c0_18 = arith.constant 0 : index
    %c0_19 = arith.constant 0 : index
    %26 = vector.load %arg4[%25, %c0_18, %c0_19] : memref<5x13x13xf32, #tpu.memory_space<vmem>>, vector<1x13x13xf32>
    %27 = vector.shape_cast %26 : vector<1x13x13xf32> to vector<13x13xf32>
    %28 = vector.shape_cast %24 : vector<13x13xf32> to vector<1x13x13xf32>
    tpu.vector_store %arg4[%25, %c0_18, %c0_19], %28 {strides = array<i32>} : memref<5x13x13xf32, #tpu.memory_space<vmem>>, vector<1x13x13xf32>,
    %c3_i32 = arith.constant 3 : i32
    %29 = arith.index_cast %c3_i32 : i32 to index
    %c0_20 = arith.constant 0 : index
    %c0_21 = arith.constant 0 : index
    %30 = vector.load %arg1[%29, %c0_20, %c0_21] : memref<5x2x2xf32, #tpu.memory_space<vmem>>, vector<1x2x2xf32>
    %31 = vector.shape_cast %30 : vector<1x2x2xf32> to vector<2x2xf32>
    %cst_22 = arith.constant dense<0.000000e+00> : vector<2x13xf32>
    %32 = tpu.matmul %31, %1, %cst_22 {dimension_numbers = #tpu.dot_dimension_numbers<[1], [0], [0], [1], [0, 0, 1, 1], [], []>} : vector<2x2xf32>, vector<2x13xf32>, vector<2x13xf32> -> vector<2x13xf32>
    %cst_23 = arith.constant dense<0.000000e+00> : vector<13x13xf32>
    %33 = tpu.matmul %0, %32, %cst_23 {dimension_numbers = #tpu.dot_dimension_numbers<[1], [0], [0], [1], [0, 0, 1, 1], [], []>} : vector<13x2xf32>, vector<2x13xf32>, vector<13x13xf32> -> vector<13x13xf32>
    %34 = arith.index_cast %c3_i32 : i32 to index
    %c0_24 = arith.constant 0 : index
    %c0_25 = arith.constant 0 : index
    %35 = vector.load %arg4[%34, %c0_24, %c0_25] : memref<5x13x13xf32, #tpu.memory_space<vmem>>, vector<1x13x13xf32>
    %36 = vector.shape_cast %35 : vector<1x13x13xf32> to vector<13x13xf32>
    %37 = vector.shape_cast %33 : vector<13x13xf32> to vector<1x13x13xf32>
    tpu.vector_store %arg4[%34, %c0_24, %c0_25], %37 {strides = array<i32>} : memref<5x13x13xf32, #tpu.memory_space<vmem>>, vector<1x13x13xf32>,
    %c4_i32 = arith.constant 4 : i32
    %38 = arith.index_cast %c4_i32 : i32 to index
    %c0_26 = arith.constant 0 : index
    %c0_27 = arith.constant 0 : index
    %39 = vector.load %arg1[%38, %c0_26, %c0_27] : memref<5x2x2xf32, #tpu.memory_space<vmem>>, vector<1x2x2xf32>
    %40 = vector.shape_cast %39 : vector<1x2x2xf32> to vector<2x2xf32>
    %cst_28 = arith.constant dense<0.000000e+00> : vector<2x13xf32>
    %41 = tpu.matmul %40, %1, %cst_28 {dimension_numbers = #tpu.dot_dimension_numbers<[1], [0], [0], [1], [0, 0, 1, 1], [], []>} : vector<2x2xf32>, vector<2x13xf32>, vector<2x13xf32> -> vector<2x13xf32>
    %cst_29 = arith.constant dense<0.000000e+00> : vector<13x13xf32>
    %42 = tpu.matmul %0, %41, %cst_29 {dimension_numbers = #tpu.dot_dimension_numbers<[1], [0], [0], [1], [0, 0, 1, 1], [], []>} : vector<13x2xf32>, vector<2x13xf32>, vector<13x13xf32> -> vector<13x13xf32>
    %43 = arith.index_cast %c4_i32 : i32 to index
    %c0_30 = arith.constant 0 : index
    %c0_31 = arith.constant 0 : index
    %44 = vector.load %arg4[%43, %c0_30, %c0_31] : memref<5x13x13xf32, #tpu.memory_space<vmem>>, vector<1x13x13xf32>
    %45 = vector.shape_cast %44 : vector<1x13x13xf32> to vector<13x13xf32>
    %46 = vector.shape_cast %42 : vector<13x13xf32> to vector<1x13x13xf32>
    tpu.vector_store %arg4[%43, %c0_30, %c0_31], %46 {strides = array<i32>} : memref<5x13x13xf32, #tpu.memory_space<vmem>>, vector<1x13x13xf32>,
    %c5_i32 = arith.constant 5 : i32
    return
  }
  func.func @transform_0(%arg0: i32) -> (i32, i32, i32) {
    %c0_i32 = arith.constant 0 : i32
    %c0_i32_0 = arith.constant 0 : i32
    %c0_i32_1 = arith.constant 0 : i32
    return %arg0, %c0_i32, %c0_i32_0 : i32, i32, i32
  }
  func.func @transform_1(%arg0: i32) -> (i32, i32) {
    %c0_i32 = arith.constant 0 : i32
    %c0_i32_0 = arith.constant 0 : i32
    %c0_i32_1 = arith.constant 0 : i32
    return %c0_i32, %c0_i32_0 : i32, i32
  }
  func.func @transform_2(%arg0: i32) -> (i32, i32) {
    %c0_i32 = arith.constant 0 : i32
    %c0_i32_0 = arith.constant 0 : i32
    %c0_i32_1 = arith.constant 0 : i32
    return %c0_i32, %c0_i32_0 : i32, i32
  }
  func.func @transform_3(%arg0: i32) -> (i32, i32, i32) {
    %c0_i32 = arith.constant 0 : i32
    %c0_i32_0 = arith.constant 0 : i32
    %c0_i32_1 = arith.constant 0 : i32
    return %arg0, %c0_i32, %c0_i32_0 : i32, i32, i32
  }
}

module attributes {stable_mosaic.version = 11 : i64} {
  func.func @_head_kernel(%arg0: i32, %arg1: i32, %arg2: memref<1x4x32xbf16, #tpu.memory_space<vmem>>, %arg3: memref<5x32xbf16, #tpu.memory_space<vmem>>, %arg4: memref<5x1xf32, #tpu.memory_space<vmem>>, %arg5: memref<1x5x4xf32, #tpu.memory_space<vmem>>) attributes {dimension_semantics = [#tpu.dimension_semantics<parallel>, #tpu.dimension_semantics<parallel>], iteration_bounds = array<i64: 2, 1>, scalar_prefetch = 0 : i64, scratch_operands = 0 : i64, tpu.core_type = #tpu.core_type<tc>, window_params = [{transform_indices = @transform_0, window_bounds = array<i64: 1, 4, 32>}, {pipeline_mode = #tpu.pipeline_mode<synchronous>, transform_indices = @transform_1, window_bounds = array<i64: 5, 32>}, {pipeline_mode = #tpu.pipeline_mode<synchronous>, transform_indices = @transform_2, window_bounds = array<i64: 5, 1>}, {transform_indices = @transform_3, window_bounds = array<i64: 1, 5, 4>}]} {
    %c0 = arith.constant 0 : index
    %c0_0 = arith.constant 0 : index
    %0 = vector.load %arg3[%c0, %c0_0] : memref<5x32xbf16, #tpu.memory_space<vmem>>, vector<5x32xbf16>
    %c0_1 = arith.constant 0 : index
    %c0_2 = arith.constant 0 : index
    %c0_3 = arith.constant 0 : index
    %1 = vector.load %arg2[%c0_1, %c0_2, %c0_3] : memref<1x4x32xbf16, #tpu.memory_space<vmem>>, vector<1x4x32xbf16>
    %2 = vector.shape_cast %1 : vector<1x4x32xbf16> to vector<4x32xbf16>
    %cst = arith.constant dense<0.000000e+00> : vector<5x4xf32>
    %3 = tpu.matmul %0, %2, %cst {dimension_numbers = #tpu.dot_dimension_numbers<[1], [1], [0], [0], [0, 0, 1, 0], [], []>} : vector<5x32xbf16>, vector<4x32xbf16>, vector<5x4xf32> -> vector<5x4xf32>
    %c0_4 = arith.constant 0 : index
    %c0_5 = arith.constant 0 : index
    %4 = vector.load %arg4[%c0_4, %c0_5] : memref<5x1xf32, #tpu.memory_space<vmem>>, vector<5x1xf32>
    %5 = vector.broadcast %4 : vector<5x1xf32> to vector<5x4xf32>
    %6 = arith.addf %3, %5 : vector<5x4xf32>
    %c0_6 = arith.constant 0 : index
    %c0_7 = arith.constant 0 : index
    %c0_8 = arith.constant 0 : index
    %7 = vector.load %arg5[%c0_6, %c0_7, %c0_8] : memref<1x5x4xf32, #tpu.memory_space<vmem>>, vector<1x5x4xf32>
    %8 = vector.shape_cast %7 : vector<1x5x4xf32> to vector<5x4xf32>
    %9 = vector.shape_cast %6 : vector<5x4xf32> to vector<1x5x4xf32>
    tpu.vector_store %arg5[%c0_6, %c0_7, %c0_8], %9 {strides = array<i32>} : memref<1x5x4xf32, #tpu.memory_space<vmem>>, vector<1x5x4xf32>,
    return
  }
  func.func @transform_0(%arg0: i32, %arg1: i32) -> (i32, i32, i32) {
    %c0_i32 = arith.constant 0 : i32
    %c0_i32_0 = arith.constant 0 : i32
    return %arg0, %arg1, %c0_i32 : i32, i32, i32
  }
  func.func @transform_1(%arg0: i32, %arg1: i32) -> (i32, i32) {
    %c0_i32 = arith.constant 0 : i32
    %c0_i32_0 = arith.constant 0 : i32
    %c0_i32_1 = arith.constant 0 : i32
    return %c0_i32, %c0_i32_0 : i32, i32
  }
  func.func @transform_2(%arg0: i32, %arg1: i32) -> (i32, i32) {
    %c0_i32 = arith.constant 0 : i32
    %c0_i32_0 = arith.constant 0 : i32
    %c0_i32_1 = arith.constant 0 : i32
    return %c0_i32, %c0_i32_0 : i32, i32
  }
  func.func @transform_3(%arg0: i32, %arg1: i32) -> (i32, i32, i32) {
    %c0_i32 = arith.constant 0 : i32
    %c0_i32_0 = arith.constant 0 : i32
    return %arg0, %c0_i32, %arg1 : i32, i32, i32
  }
}

</mosaic_0001>

<llo_original>
// kernel: segmenter_forward.3
$region0: #{segmenter_forward.3}
  #allocation0 [shape = 'u32[]', space=smem, size = 0x4, offset = 0x4, fixed_abs, tag = 'smem constant byte address 0x4 - core index']
  #allocation1 [shape = 'u32[144,128]{1,0:T(1,128)}', space=vmem, size = 0x12000, scoped, tag = 'internal scratch']
  %s0 = inlined_call_operand.vmem [shape: bf16[2,4,256], index: 0, kind: input, shape index: {}]
  %s1 = inlined_call_operand.vmem [shape: bf16[256,32], index: 1, kind: input, shape index: {}]
  %s2 = inlined_call_operand.vmem [shape: f32[1,32], index: 2, kind: input, shape index: {}]
  %s3 = inlined_call_operand.vmem [shape: bf16[1,4,32], index: 3, kind: input, shape index: {}]
  %s4 = inlined_call_operand.vmem [shape: bf16[2,4,32], index: 4, kind: output, shape index: {}]
  %s5 = sld [smem:[#allocation0]]
  $region49: #{segmenter_forward.3} parent=0
    _
  %s7 = ssub.s32 1, %s5
  %s8 = scalar_select 0, %s7, %s5
  loop: start=0, step=1, limit=4
  $region2: #{segmenter_forward.3} parent=0 // loop_pre_header
    _
  $region3: #{segmenter_forward.3} parent=0 // loop_header
    %s10 = sphi 0, %s14
    %p11 = scmp.ge.s32.totalorder %s10, 4
    %s17 = sphi 0, %s29
    %s18 = sphi 0, %s25
    %s19 = sphi 0, %s17
    %s20 = sphi 0, %s18
    %s21 = sphi 0, %s19
    %s22 = sphi 0, %s20
    %s34 = sphi 0, %s36
    %s37 = sphi 0, %s34
    %s38 = sphi 0, %s37
    %s54 = sphi 0, %s38
    %s58 = sphi 0, %s58
    %s60 = sphi 0, %s58
    %s61 = sphi 0, %s60
    %s75 = sphi 0, %s61
    %s79 = sphi 0, %s79
    %s81 = sphi 0, %s79
    %s82 = sphi 0, %s81
    %s96 = sphi 0, %s82
    %s102 = sphi 0, %s104
    %s105 = sphi 0, %s102
    %s106 = sphi 0, %s105
    %s122 = sphi 0, %s106
    %s130 = sphi 0, %s132
    %s133 = sphi 0, %s130
    %s134 = sphi 0, %s133
    %s150 = sphi 0, %s134
  $region4: #{segmenter_forward.3} parent=0 // loop_header_branch
    %13 = sbr.rel (%p11) target = $region8
  $region5: #{segmenter_forward.3} parent=0 // loop_body
    %s15 = ssub.s32 %s10, 1
    %s16 = ssub.s32 %s10, 2
    %s23 = sadd.s32 1, %s18
    %p24 = scmp.ge.s32.totalorder %s23, 1
    %s25 = scalar_select %p24, 0, %s23
    %s26 = sadd.s32 1, %s17
    %s27 = scalar_select %p24, %s26, %s17
    %p28 = scmp.ge.s32.totalorder %s27, 2
    %s29 = scalar_select %p28, 0, %s27
    %s30 = ssub.s32 %s17, %s29
    %s31 = ssub.s32 %s18, %s25
    %s32 = sor.u32 %s30, %s31
    %p33 = scmp.eq.s32.totalorder %s32, 0
    %s35 = sadd.s32 %s34, 1
    %s36 = scalar_select %p33, %s34, %s35
    %p39 = pneg %p33
    %p40 = scmp.eq.s32.totalorder %s10, 1
    %p41 = por %p39, %p40
    %p42 = scmp.ne.s32.totalorder %s34, %s37
    %p43 = scmp.eq.s32.totalorder %s10, 0
    %p44 = por %p42, %p43
    %p45 = scmp.ne.s32.totalorder %s34, %s37
    %p46 = scmp.eq.s32.totalorder %s15, 1
    %p47 = por %p45, %p46
    %p48 = scmp.ne.s32.totalorder %s37, %s38
    %p49 = scmp.eq.s32.totalorder %s15, 0
    %p50 = por %p48, %p49
    %p51 = scmp.ne.s32.totalorder %s37, %s38
    %p52 = scmp.eq.s32.totalorder %s16, 1
    %p53 = por %p51, %p52
    %p55 = scmp.ne.s32.totalorder %s38, %s54
    %p56 = scmp.eq.s32.totalorder %s16, 0
    %p57 = por %p55, %p56
    %s59 = sadd.s32 %s58, 1
    %p62 = scmp.eq.s32.totalorder %s10, 1
    %p63 = scmp.ne.s32.totalorder %s58, %s60
    %p64 = scmp.eq.s32.totalorder %s10, 0
    %p65 = por %p63, %p64
    %p66 = scmp.ne.s32.totalorder %s58, %s60
    %p67 = scmp.eq.s32.totalorder %s15, 1
    %p68 = por %p66, %p67
    %p69 = scmp.ne.s32.totalorder %s60, %s61
    %p70 = scmp.eq.s32.totalorder %s15, 0
    %p71 = por %p69, %p70
    %p72 = scmp.ne.s32.totalorder %s60, %s61
    %p73 = scmp.eq.s32.totalorder %s16, 1
    %p74 = por %p72, %p73
    %p76 = scmp.ne.s32.totalorder %s61, %s75
    %p77 = scmp.eq.s32.totalorder %s16, 0
    %p78 = por %p76, %p77
    %s80 = sadd.s32 %s79, 1
    %p83 = scmp.eq.s32.totalorder %s10, 1
    %p84 = scmp.ne.s32.totalorder %s79, %s81
    %p85 = scmp.eq.s32.totalorder %s10, 0
    %p86 = por %p84, %p85
    %p87 = scmp.ne.s32.totalorder %s79, %s81
    %p88 = scmp.eq.s32.totalorder %s15, 1
    %p89 = por %p87, %p88
    %p90 = scmp.ne.s32.totalorder %s81, %s82
    %p91 = scmp.eq.s32.totalorder %s15, 0
    %p92 = por %p90, %p91
    %p93 = scmp.ne.s32.totalorder %s81, %s82
    %p94 = scmp.eq.s32.totalorder %s16, 1
    %p95 = por %p93, %p94
    %p97 = scmp.ne.s32.totalorder %s82, %s96
    %p98 = scmp.eq.s32.totalorder %s16, 0
    %p99 = por %p97, %p98
    %s100 = ssub.s32 %s18, %s25
    %p101 = scmp.eq.s32.totalorder %s100, 0
    %s103 = sadd.s32 %s102, 1
    %s104 = scalar_select %p101, %s102, %s103
    %p107 = pneg %p101
    %p108 = scmp.eq.s32.totalorder %s10, 1
    %p109 = por %p107, %p108
    %p110 = scmp.ne.s32.totalorder %s102, %s105
    %p111 = scmp.eq.s32.totalorder %s10, 0
    %p112 = por %p110, %p111
    %p113 = scmp.ne.s32.totalorder %s102, %s105
    %p114 = scmp.eq.s32.totalorder %s15, 1
    %p115 = por %p113, %p114
    %p116 = scmp.ne.s32.totalorder %s105, %s106
    %p117 = scmp.eq.s32.totalorder %s15, 0
    %p118 = por %p116, %p117
    %p119 = scmp.ne.s32.totalorder %s105, %s106
    %p120 = scmp.eq.s32.totalorder %s16, 1
    %p121 = por %p119, %p120
    %p123 = scmp.ne.s32.totalorder %s106, %s122
    %p124 = scmp.eq.s32.totalorder %s16, 0
    %p125 = por %p123, %p124
    %s126 = ssub.s32 %s17, %s29
    %s127 = ssub.s32 %s18, %s25
    %s128 = sor.u32 %s126, %s127
    %p129 = scmp.eq.s32.totalorder %s128, 0
    %s131 = sadd.s32 %s130, 1
    %s132 = scalar_select %p129, %s130, %s131
    %p135 = pneg %p129
    %p136 = scmp.eq.s32.totalorder %s10, 1
    %p137 = por %p135, %p136
    %p138 = scmp.ne.s32.totalorder %s130, %s133
    %p139 = scmp.eq.s32.totalorder %s10, 0
    %p140 = por %p138, %p139
    %p141 = scmp.ne.s32.totalorder %s130, %s133
    %p142 = scmp.eq.s32.totalorder %s15, 1
    %p143 = por %p141, %p142
    %p144 = scmp.ne.s32.totalorder %s133, %s134
    %p145 = scmp.eq.s32.totalorder %s15, 0
    %p146 = por %p144, %p145
    %p147 = scmp.ne.s32.totalorder %s133, %s134
    %p148 = scmp.eq.s32.totalorder %s16, 1
    %p149 = por %p147, %p148
    %p151 = scmp.ne.s32.totalorder %s134, %s150
    %p152 = scmp.eq.s32.totalorder %s16, 0
    %p153 = por %p151, %p152
    %p154 = scmp.le.s32.totalorder 1, %s10
    %p155 = scmp.lt.s32.totalorder %s10, 3
    %p156 = pnand %p154, %p155
    %p157 = pneg %p156
    // Predicated region
    $region9: #{segmenter_forward.3} parent=5 // pred_check
      _
    $region10: #{segmenter_forward.3} parent=5 // pred_check_branch
      %159 = sbr.rel (%p156) target = $region12
    $region11: #{segmenter_forward.3} parent=5 // pred_region
      %s160 = ssub.s32 %s10, 1
      // Predicated region
      $region13: #{segmenter_forward.3} parent=11 // pred_check
        %p161 = pneg %p71
      $region14: #{segmenter_forward.3} parent=11 // pred_check_branch
        %163 = sbr.rel (%p161) target = $region16
      $region15: #{segmenter_forward.3} parent=11 // pred_region
        _
      $region16: #{segmenter_forward.3} parent=11 // pred_fallthru
        _
      // Predicated region
      $region17: #{segmenter_forward.3} parent=11 // pred_check
        %p164 = pneg %p92
      $region18: #{segmenter_forward.3} parent=11 // pred_check_branch
        %166 = sbr.rel (%p164) target = $region20
      $region19: #{segmenter_forward.3} parent=11 // pred_region
        _
      $region20: #{segmenter_forward.3} parent=11 // pred_fallthru
        _
      // Predicated region
      $region21: #{segmenter_forward.3} parent=11 // pred_check
        %p167 = pneg %p118
      $region22: #{segmenter_forward.3} parent=11 // pred_check_branch
        %169 = sbr.rel (%p167) target = $region24
      $region23: #{segmenter_forward.3} parent=11 // pred_region
        %p170 = scmp.lt.s32.totalorder %s20, 0
        %s171 = scalar_select %p170, %s20, 0
        %s172 = smul.addr %s171, 2
        %s173 = scalar_lea.vmem %s3, %s172
      $region24: #{segmenter_forward.3} parent=11 // pred_fallthru
        _
    $region12: #{segmenter_forward.3} parent=5 // pred_fallthru
      _
    %p174 = scmp.lt.s32.totalorder %s10, 2
    // Predicated region
    $region25: #{segmenter_forward.3} parent=5 // pred_check
      %p175 = pneg %p174
    $region26: #{segmenter_forward.3} parent=5 // pred_check_branch
      %177 = sbr.rel (%p175) target = $region28
    $region27: #{segmenter_forward.3} parent=5 // pred_region
      // Predicated region
      $region29: #{segmenter_forward.3} parent=27 // pred_check
        %p178 = pneg %p44
      $region30: #{segmenter_forward.3} parent=27 // pred_check_branch
        %180 = sbr.rel (%p178) target = $region32
      $region31: #{segmenter_forward.3} parent=27 // pred_region
        %p181 = scmp.lt.s32.totalorder %s17, 1
        %s182 = scalar_select %p181, %s17, 1
        %p183 = scmp.lt.s32.totalorder %s18, 0
        %s184 = scalar_select %p183, %s18, 0
        %s185 = smul.addr %s184, 2
        %s186 = smul.addr %s182, 2
        %s187 = sadd.s32 %s185, %s186
        %s188 = smul.addr %s187, 2
        %s189 = scalar_lea.vmem %s0, %s188
      $region32: #{segmenter_forward.3} parent=27 // pred_fallthru
        _
    $region28: #{segmenter_forward.3} parent=5 // pred_fallthru
      _
    %p190 = scmp.le.s32.totalorder 1, %s10
    %p191 = scmp.lt.s32.totalorder %s10, 3
    %p192 = pnand %p190, %p191
    %p193 = pneg %p192
    // Predicated region
    $region33: #{segmenter_forward.3} parent=5 // pred_check
      _
    $region34: #{segmenter_forward.3} parent=5 // pred_check_branch
      %195 = sbr.rel (%p192) target = $region36
    $region35: #{segmenter_forward.3} parent=5 // pred_region
      %s196 = ssub.s32 %s10, 1
      %p197 = scmp.lt.s32.totalorder %s19, 1
      %s198 = scalar_select %p197, %s19, 1
      %p199 = scmp.lt.s32.totalorder %s20, 0
      %s200 = scalar_select %p199, %s20, 0
      %s201 = smul.addr %s200, 2
      %s202 = smul.addr %s198, 2
      %s203 = sadd.s32 %s201, %s202
      %s204 = smul.addr %s203, 2
      %s205 = scalar_lea.vmem %s0, %s204
      %p206 = pneg %p50
      %p207 = pneg %p47
      %p208 = pneg %p71
      %p209 = pneg %p68
      %p210 = pneg %p92
      %p211 = pneg %p89
      %p212 = scmp.lt.s32.totalorder %s20, 0
      %s213 = scalar_select %p212, %s20, 0
      %s214 = smul.addr %s213, 2
      %s215 = scalar_lea.vmem %s3, %s214
      %p216 = pneg %p118
      %p217 = pneg %p115
      %p218 = pneg %p146
      %p219 = pneg %p143
      %p220 = scmp.lt.s32.totalorder %s19, 1
      %s221 = scalar_select %p220, %s19, 1
      %p222 = scmp.lt.s32.totalorder %s20, 0
      %s223 = scalar_select %p222, %s20, 0
      %s224 = sadd.s32 %s223, %s221
      %s225 = smul.addr %s224, 2
      %s226 = scalar_lea.vmem %s4, %s225
      %p227 = scmp.lt.s32.totalorder %s19, 1
      %s228 = scalar_select %p227, %s19, 1
      %p229 = scmp.lt.s32.totalorder %s20, 0
      %s230 = scalar_select %p229, %s20, 0
      %s231 = smul.addr %s230, 2
      %s232 = smul.addr %s228, 2
      %s233 = sadd.s32 %s231, %s232
      %s234 = smul.addr %s233, 2
      %s235 = scalar_lea.vmem %s0, %s234
      %p236 = scmp.lt.s32.totalorder %s20, 0
      %s237 = scalar_select %p236, %s20, 0
      %s238 = smul.addr %s237, 2
      %s239 = scalar_lea.vmem %s3, %s238
      %p240 = scmp.lt.s32.totalorder %s19, 1
      %s241 = scalar_select %p240, %s19, 1
      %p242 = scmp.lt.s32.totalorder %s20, 0
      %s243 = scalar_select %p242, %s20, 0
      %s244 = sadd.s32 %s243, %s241
      %s245 = smul.addr %s244, 2
      %s246 = scalar_lea.vmem %s4, %s245
      %v248 = vld [vmem:[%s235] sm:$0xf]
      %v249 = vld [vmem:[%s1] sm:$0xf]
      %v250 = vld [vmem:[%s1 + $0x4] sm:$0xf]
      %v251 = vld [vmem:[%s1 + $0x8] sm:$0xf]
      %v252 = vld [vmem:[%s1 + $0xc] sm:$0xf]
      %v253 = vld [vmem:[%s1 + $0x10] sm:$0xf]
      %v254 = vld [vmem:[%s1 + $0x14] sm:$0xf]
      %v255 = vld [vmem:[%s1 + $0x18] sm:$0xf]
      %v256 = vld [vmem:[%s1 + $0x1c] sm:$0xf]
      %v257 = vld [vmem:[%s1 + $0x20] sm:$0xf]
      %v258 = vld [vmem:[%s1 + $0x24] sm:$0xf]
      %v259 = vld [vmem:[%s1 + $0x28] sm:$0xf]
      %v260 = vld [vmem:[%s1 + $0x2c] sm:$0xf]
      %v261 = vld [vmem:[%s1 + $0x30] sm:$0xf]
      %v262 = vld [vmem:[%s1 + $0x34] sm:$0xf]
      %v263 = vld [vmem:[%s1 + $0x38] sm:$0xf]
      %v264 = vld [vmem:[%s1 + $0x3c] sm:$0xf]
      %v265 = vld [vmem:[%s1 + $0x40] sm:$0xf]
      %v266 = vld [vmem:[%s1 + $0x44] sm:$0xf]
      %v267 = vld [vmem:[%s1 + $0x48] sm:$0xf]
      %v268 = vld [vmem:[%s1 + $0x4c] sm:$0xf]
      %v269 = vld [vmem:[%s1 + $0x50] sm:$0xf]
      %v270 = vld [vmem:[%s1 + $0x54] sm:$0xf]
      %v271 = vld [vmem:[%s1 + $0x58] sm:$0xf]
      %v272 = vld [vmem:[%s1 + $0x5c] sm:$0xf]
      %v273 = vld [vmem:[%s1 + $0x60] sm:$0xf]
      %v274 = vld [vmem:[%s1 + $0x64] sm:$0xf]
      %v275 = vld [vmem:[%s1 + $0x68] sm:$0xf]
      %v276 = vld [vmem:[%s1 + $0x6c] sm:$0xf]
      %v277 = vld [vmem:[%s1 + $0x70] sm:$0xf]
      %v278 = vld [vmem:[%s1 + $0x74] sm:$0xf]
      %v279 = vld [vmem:[%s1 + $0x78] sm:$0xf]
      %v280 = vld [vmem:[%s1 + $0x7c] sm:$0xf]
      %v281 = vld [vmem:[%s2] sm:$0x1]
      %v283 = vlaneseq
      %v284 = vshrl.u32 %v283, 7
      %v285 = vsub.s32 0, %v284
      %v286 = vrot.slane %v281, %v285
      %v290 = vunpack.c.l.s4 1983009808
      %v291 = vunpack.c.0.s8 %v290
      %v292 = vlaneseq
      %v293 = vshrl.u32 %v292, 7
      %v294 = vsub.s32 %v291, %v293
      %v295 = vrot.slane %v248, %v294
      %v296 = vcombine.high %v295, %v295
      %v331 = vunpack.c.l.b16 %v249
      %v332 = vunpack.c.l.b16 %v250
      %v333 = vunpack.c.l.b16 %v251
      %v334 = vunpack.c.l.b16 %v252
      %v335 = vunpack.c.l.b16 %v253
      %v336 = vunpack.c.l.b16 %v254
      %v337 = vunpack.c.l.b16 %v255
      %v338 = vunpack.c.l.b16 %v256
      %v339 = vunpack.c.l.b16 %v257
      %v340 = vunpack.c.l.b16 %v258
      %v341 = vunpack.c.l.b16 %v259
      %v342 = vunpack.c.l.b16 %v260
      %v343 = vunpack.c.l.b16 %v261
      %v344 = vunpack.c.l.b16 %v262
      %v345 = vunpack.c.l.b16 %v263
      %v346 = vunpack.c.l.b16 %v264
      %v347 = vunpack.c.l.b16 %v265
      %v348 = vunpack.c.l.b16 %v266
      %v349 = vunpack.c.l.b16 %v267
      %v350 = vunpack.c.l.b16 %v268
      %v351 = vunpack.c.l.b16 %v269
      %v352 = vunpack.c.l.b16 %v270
      %v353 = vunpack.c.l.b16 %v271
      %v354 = vunpack.c.l.b16 %v272
      %v355 = vunpack.c.l.b16 %v273
      %v356 = vunpack.c.l.b16 %v274
      %v357 = vunpack.c.l.b16 %v275
      %v358 = vunpack.c.l.b16 %v276
      %v359 = vunpack.c.l.b16 %v277
      %v360 = vunpack.c.l.b16 %v278
      %v361 = vunpack.c.l.b16 %v279
      %v362 = vunpack.c.l.b16 %v280
      %v363 = vpack.c.b16 %v332, %v331
      %v364 = vpack.c.b16 %v334, %v333
      %v365 = vpack.c.b16 %v336, %v335
      %v366 = vpack.c.b16 %v338, %v337
      %v367 = vpack.c.b16 %v340, %v339
      %v368 = vpack.c.b16 %v342, %v341
      %v369 = vpack.c.b16 %v344, %v343
      %v370 = vpack.c.b16 %v346, %v345
      %v371 = vpack.c.b16 %v348, %v347
      %v372 = vpack.c.b16 %v350, %v349
      %v373 = vpack.c.b16 %v352, %v351
      %v374 = vpack.c.b16 %v354, %v353
      %v375 = vpack.c.b16 %v356, %v355
      %v376 = vpack.c.b16 %v358, %v357
      %v377 = vpack.c.b16 %v360, %v359
      %v378 = vpack.c.b16 %v362, %v361
      %395 = vmatprep.subr.bf16.mxu0 0
      %396 = vmatpush1.bf16.msra.mxu0 %v363
      %397 = vmatprep.subr.bf16.mxu0 0
      %398 = vmatpush1.bf16.msra.mxu0 %v364
      %399 = vmatprep.subr.bf16.mxu0 0
      %400 = vmatpush1.bf16.msra.mxu0 %v365
      %401 = vmatprep.subr.bf16.mxu0 0
      %402 = vmatpush1.bf16.msra.mxu0 %v366
      %403 = vmatprep.subr.bf16.mxu0 0
      %404 = vmatpush1.bf16.msra.mxu0 %v367
      %405 = vmatprep.subr.bf16.mxu0 0
      %406 = vmatpush1.bf16.msra.mxu0 %v368
      %407 = vmatprep.subr.bf16.mxu0 0
      %408 = vmatpush1.bf16.msra.mxu0 %v369
      %409 = vmatprep.subr.bf16.mxu0 0
      %410 = vmatpush1.bf16.msra.mxu0 %v370
      %411 = vmatprep.subr.bf16.mxu0 0
      %412 = vmatpush1.bf16.msra.mxu0 %v371
      %413 = vmatprep.subr.bf16.mxu0 0
      %414 = vmatpush1.bf16.msra.mxu0 %v372
      %415 = vmatprep.subr.bf16.mxu0 0
      %416 = vmatpush1.bf16.msra.mxu0 %v373
      %417 = vmatprep.subr.bf16.mxu0 0
      %418 = vmatpush1.bf16.msra.mxu0 %v374
      %419 = vmatprep.subr.bf16.mxu0 0
      %420 = vmatpush1.bf16.msra.mxu0 %v375
      %421 = vmatprep.subr.bf16.mxu0 0
      %422 = vmatpush1.bf16.msra.mxu0 %v376
      %423 = vmatprep.subr.bf16.mxu0 0
      %424 = vmatpush1.bf16.msra.mxu0 %v377
      %425 = vmatprep.subr.bf16.mxu0 0
      %426 = vmatpush1.bf16.msra.mxu0 %v378
      %427 = vmatprep.mubr.bf16.mxu0 %v296
      %428 = vmatmul.mubr.bf16.gmra.mrb[0].mxu0 %v295
      %v429 = vpop.f32.mrb[0].mxu0
      %v430 = vadd.f32 %v286, %v429
      %v431 = vpop.f32.mrb[0].mxu0
      %v432 = vpop.f32.mrb[0].mxu0
      %v433 = vpop.f32.mrb[0].mxu0
      %434 = vdwg.mxu0
      %v435 = vld [vmem:[%s239] sm:$0x3]
      %v436 = vunpack.c.l.bf16 %v435
      %v437 = vadd.f32 %v430, %v436
      %v438 = vpack.c.bf16 %v437, %v437
      %vm439 = vcmask 254976
      %440 = vst.msk [vmem:[%s246] sm:$0x3] %vm439, %v438
      %p441 = scmp.lt.s32.totalorder %s19, 1
      %s442 = scalar_select %p441, %s19, 1
      %p443 = scmp.lt.s32.totalorder %s20, 0
      %s444 = scalar_select %p443, %s20, 0
      %s445 = sadd.s32 %s444, %s442
      %s446 = smul.addr %s445, 2
      %s447 = scalar_lea.vmem %s4, %s446
      // Predicated region
      $region37: #{segmenter_forward.3} parent=35 // pred_check
        %p448 = pneg %p143
      $region38: #{segmenter_forward.3} parent=35 // pred_check_branch
        %450 = sbr.rel (%p448) target = $region40
      $region39: #{segmenter_forward.3} parent=35 // pred_region
        _
      $region40: #{segmenter_forward.3} parent=35 // pred_fallthru
        _
    $region36: #{segmenter_forward.3} parent=5 // pred_fallthru
      _
    %p451 = scmp.le.s32.totalorder 2, %s10
    // Predicated region
    $region41: #{segmenter_forward.3} parent=5 // pred_check
      %p452 = pneg %p451
    $region42: #{segmenter_forward.3} parent=5 // pred_check_branch
      %454 = sbr.rel (%p452) target = $region44
    $region43: #{segmenter_forward.3} parent=5 // pred_region
      %s455 = ssub.s32 %s10, 2
      // Predicated region
      $region45: #{segmenter_forward.3} parent=43 // pred_check
        %p456 = pneg %p149
      $region46: #{segmenter_forward.3} parent=43 // pred_check_branch
        %458 = sbr.rel (%p456) target = $region48
      $region47: #{segmenter_forward.3} parent=43 // pred_region
        %p459 = scmp.lt.s32.totalorder %s21, 1
        %s460 = scalar_select %p459, %s21, 1
        %p461 = scmp.lt.s32.totalorder %s22, 0
        %s462 = scalar_select %p461, %s22, 0
        %s463 = sadd.s32 %s462, %s460
        %s464 = smul.addr %s463, 2
        %s465 = scalar_lea.vmem %s4, %s464
      $region48: #{segmenter_forward.3} parent=43 // pred_fallthru
        _
    $region44: #{segmenter_forward.3} parent=5 // pred_fallthru
      _
  $region6: #{segmenter_forward.3} parent=0 // loop_footer
    %s14 = sadd.s32 1, %s10
  $region7: #{segmenter_forward.3} parent=0 // loop_footer_branch
    %9 = sbr.rel target = $region3
  $region8: #{segmenter_forward.3} parent=0 // loop_exit
    _

// kernel: segmenter_forward.4
$region0: #{segmenter_forward.4}
  #allocation0 [shape = 'u32[]', space=smem, size = 0x4, offset = 0x4, fixed_abs, tag = 'smem constant byte address 0x4 - core index']
  #allocation1 [shape = 'u32[144,128]{1,0:T(1,128)}', space=vmem, size = 0x12000, scoped, tag = 'internal scratch']
  %s0 = inlined_call_operand.vmem [shape: bf16[2,4,32], index: 0, kind: input, shape index: {}]
  %s1 = inlined_call_operand.vmem [shape: bf16[5,32], index: 1, kind: input, shape index: {}]
  %s2 = inlined_call_operand.vmem [shape: f32[5,1], index: 2, kind: input, shape index: {}]
  %s3 = inlined_call_operand.vmem [shape: f32[2,5,4], index: 3, kind: output, shape index: {}]
  %s4 = sld [smem:[#allocation0]]
  $region45: #{segmenter_forward.4} parent=0
    _
  %s6 = ssub.s32 1, %s4
  %s7 = scalar_select 0, %s6, %s4
  loop: start=0, step=1, limit=4
  $region2: #{segmenter_forward.4} parent=0 // loop_pre_header
    _
  $region3: #{segmenter_forward.4} parent=0 // loop_header
    %s9 = sphi 0, %s13
    %p10 = scmp.ge.s32.totalorder %s9, 4
    %s16 = sphi 0, %s28
    %s17 = sphi 0, %s24
    %s18 = sphi 0, %s16
    %s19 = sphi 0, %s17
    %s20 = sphi 0, %s18
    %s21 = sphi 0, %s19
    %s33 = sphi 0, %s35
    %s36 = sphi 0, %s33
    %s37 = sphi 0, %s36
    %s53 = sphi 0, %s37
    %s57 = sphi 0, %s57
    %s59 = sphi 0, %s57
    %s60 = sphi 0, %s59
    %s74 = sphi 0, %s60
    %s78 = sphi 0, %s78
    %s80 = sphi 0, %s78
    %s81 = sphi 0, %s80
    %s95 = sphi 0, %s81
    %s103 = sphi 0, %s105
    %s106 = sphi 0, %s103
    %s107 = sphi 0, %s106
    %s123 = sphi 0, %s107
  $region4: #{segmenter_forward.4} parent=0 // loop_header_branch
    %12 = sbr.rel (%p10) target = $region8
  $region5: #{segmenter_forward.4} parent=0 // loop_body
    %s14 = ssub.s32 %s9, 1
    %s15 = ssub.s32 %s9, 2
    %s22 = sadd.s32 1, %s17
    %p23 = scmp.ge.s32.totalorder %s22, 1
    %s24 = scalar_select %p23, 0, %s22
    %s25 = sadd.s32 1, %s16
    %s26 = scalar_select %p23, %s25, %s16
    %p27 = scmp.ge.s32.totalorder %s26, 2
    %s28 = scalar_select %p27, 0, %s26
    %s29 = ssub.s32 %s16, %s28
    %s30 = ssub.s32 %s17, %s24
    %s31 = sor.u32 %s29, %s30
    %p32 = scmp.eq.s32.totalorder %s31, 0
    %s34 = sadd.s32 %s33, 1
    %s35 = scalar_select %p32, %s33, %s34
    %p38 = pneg %p32
    %p39 = scmp.eq.s32.totalorder %s9, 1
    %p40 = por %p38, %p39
    %p41 = scmp.ne.s32.totalorder %s33, %s36
    %p42 = scmp.eq.s32.totalorder %s9, 0
    %p43 = por %p41, %p42
    %p44 = scmp.ne.s32.totalorder %s33, %s36
    %p45 = scmp.eq.s32.totalorder %s14, 1
    %p46 = por %p44, %p45
    %p47 = scmp.ne.s32.totalorder %s36, %s37
    %p48 = scmp.eq.s32.totalorder %s14, 0
    %p49 = por %p47, %p48
    %p50 = scmp.ne.s32.totalorder %s36, %s37
    %p51 = scmp.eq.s32.totalorder %s15, 1
    %p52 = por %p50, %p51
    %p54 = scmp.ne.s32.totalorder %s37, %s53
    %p55 = scmp.eq.s32.totalorder %s15, 0
    %p56 = por %p54, %p55
    %s58 = sadd.s32 %s57, 1
    %p61 = scmp.eq.s32.totalorder %s9, 1
    %p62 = scmp.ne.s32.totalorder %s57, %s59
    %p63 = scmp.eq.s32.totalorder %s9, 0
    %p64 = por %p62, %p63
    %p65 = scmp.ne.s32.totalorder %s57, %s59
    %p66 = scmp.eq.s32.totalorder %s14, 1
    %p67 = por %p65, %p66
    %p68 = scmp.ne.s32.totalorder %s59, %s60
    %p69 = scmp.eq.s32.totalorder %s14, 0
    %p70 = por %p68, %p69
    %p71 = scmp.ne.s32.totalorder %s59, %s60
    %p72 = scmp.eq.s32.totalorder %s15, 1
    %p73 = por %p71, %p72
    %p75 = scmp.ne.s32.totalorder %s60, %s74
    %p76 = scmp.eq.s32.totalorder %s15, 0
    %p77 = por %p75, %p76
    %s79 = sadd.s32 %s78, 1
    %p82 = scmp.eq.s32.totalorder %s9, 1
    %p83 = scmp.ne.s32.totalorder %s78, %s80
    %p84 = scmp.eq.s32.totalorder %s9, 0
    %p85 = por %p83, %p84
    %p86 = scmp.ne.s32.totalorder %s78, %s80
    %p87 = scmp.eq.s32.totalorder %s14, 1
    %p88 = por %p86, %p87
    %p89 = scmp.ne.s32.totalorder %s80, %s81
    %p90 = scmp.eq.s32.totalorder %s14, 0
    %p91 = por %p89, %p90
    %p92 = scmp.ne.s32.totalorder %s80, %s81
    %p93 = scmp.eq.s32.totalorder %s15, 1
    %p94 = por %p92, %p93
    %p96 = scmp.ne.s32.totalorder %s81, %s95
    %p97 = scmp.eq.s32.totalorder %s15, 0
    %p98 = por %p96, %p97
    %s99 = ssub.s32 %s16, %s28
    %s100 = ssub.s32 %s17, %s24
    %s101 = sor.u32 %s99, %s100
    %p102 = scmp.eq.s32.totalorder %s101, 0
    %s104 = sadd.s32 %s103, 1
    %s105 = scalar_select %p102, %s103, %s104
    %p108 = pneg %p102
    %p109 = scmp.eq.s32.totalorder %s9, 1
    %p110 = por %p108, %p109
    %p111 = scmp.ne.s32.totalorder %s103, %s106
    %p112 = scmp.eq.s32.totalorder %s9, 0
    %p113 = por %p111, %p112
    %p114 = scmp.ne.s32.totalorder %s103, %s106
    %p115 = scmp.eq.s32.totalorder %s14, 1
    %p116 = por %p114, %p115
    %p117 = scmp.ne.s32.totalorder %s106, %s107
    %p118 = scmp.eq.s32.totalorder %s14, 0
    %p119 = por %p117, %p118
    %p120 = scmp.ne.s32.totalorder %s106, %s107
    %p121 = scmp.eq.s32.totalorder %s15, 1
    %p122 = por %p120, %p121
    %p124 = scmp.ne.s32.totalorder %s107, %s123
    %p125 = scmp.eq.s32.totalorder %s15, 0
    %p126 = por %p124, %p125
    %p127 = scmp.le.s32.totalorder 1, %s9
    %p128 = scmp.lt.s32.totalorder %s9, 3
    %p129 = pnand %p127, %p128
    %p130 = pneg %p129
    // Predicated region
    $region9: #{segmenter_forward.4} parent=5 // pred_check
      _
    $region10: #{segmenter_forward.4} parent=5 // pred_check_branch
      %132 = sbr.rel (%p129) target = $region12
    $region11: #{segmenter_forward.4} parent=5 // pred_region
      %s133 = ssub.s32 %s9, 1
      // Predicated region
      $region13: #{segmenter_forward.4} parent=11 // pred_check
        %p134 = pneg %p70
      $region14: #{segmenter_forward.4} parent=11 // pred_check_branch
        %136 = sbr.rel (%p134) target = $region16
      $region15: #{segmenter_forward.4} parent=11 // pred_region
        _
      $region16: #{segmenter_forward.4} parent=11 // pred_fallthru
        _
      // Predicated region
      $region17: #{segmenter_forward.4} parent=11 // pred_check
        %p137 = pneg %p91
      $region18: #{segmenter_forward.4} parent=11 // pred_check_branch
        %139 = sbr.rel (%p137) target = $region20
      $region19: #{segmenter_forward.4} parent=11 // pred_region
        _
      $region20: #{segmenter_forward.4} parent=11 // pred_fallthru
        _
    $region12: #{segmenter_forward.4} parent=5 // pred_fallthru
      _
    %p140 = scmp.lt.s32.totalorder %s9, 2
    // Predicated region
    $region21: #{segmenter_forward.4} parent=5 // pred_check
      %p141 = pneg %p140
    $region22: #{segmenter_forward.4} parent=5 // pred_check_branch
      %143 = sbr.rel (%p141) target = $region24
    $region23: #{segmenter_forward.4} parent=5 // pred_region
      // Predicated region
      $region25: #{segmenter_forward.4} parent=23 // pred_check
        %p144 = pneg %p43
      $region26: #{segmenter_forward.4} parent=23 // pred_check_branch
        %146 = sbr.rel (%p144) target = $region28
      $region27: #{segmenter_forward.4} parent=23 // pred_region
        %p147 = scmp.lt.s32.totalorder %s16, 1
        %s148 = scalar_select %p147, %s16, 1
        %p149 = scmp.lt.s32.totalorder %s17, 0
        %s150 = scalar_select %p149, %s17, 0
        %s151 = sadd.s32 %s150, %s148
        %s152 = smul.addr %s151, 2
        %s153 = scalar_lea.vmem %s0, %s152
      $region28: #{segmenter_forward.4} parent=23 // pred_fallthru
        _
    $region24: #{segmenter_forward.4} parent=5 // pred_fallthru
      _
    %p154 = scmp.le.s32.totalorder 1, %s9
    %p155 = scmp.lt.s32.totalorder %s9, 3
    %p156 = pnand %p154, %p155
    %p157 = pneg %p156
    // Predicated region
    $region29: #{segmenter_forward.4} parent=5 // pred_check
      _
    $region30: #{segmenter_forward.4} parent=5 // pred_check_branch
      %159 = sbr.rel (%p156) target = $region32
    $region31: #{segmenter_forward.4} parent=5 // pred_region
      %s160 = ssub.s32 %s9, 1
      %p161 = scmp.lt.s32.totalorder %s18, 1
      %s162 = scalar_select %p161, %s18, 1
      %p163 = scmp.lt.s32.totalorder %s19, 0
      %s164 = scalar_select %p163, %s19, 0
      %s165 = sadd.s32 %s164, %s162
      %s166 = smul.addr %s165, 2
      %s167 = scalar_lea.vmem %s0, %s166
      %p168 = pneg %p49
      %p169 = pneg %p46
      %p170 = pneg %p70
      %p171 = pneg %p67
      %p172 = pneg %p91
      %p173 = pneg %p88
      %p174 = pneg %p119
      %p175 = pneg %p116
      %p176 = scmp.lt.s32.totalorder %s18, 1
      %s177 = scalar_select %p176, %s18, 1
      %p178 = scmp.lt.s32.totalorder %s19, 0
      %s179 = scalar_select %p178, %s19, 0
      %s180 = sadd.s32 %s179, %s177
      %s181 = smul.addr %s180, 8
      %s182 = scalar_lea.vmem %s3, %s181
      %p183 = scmp.lt.s32.totalorder %s18, 1
      %s184 = scalar_select %p183, %s18, 1
      %p185 = scmp.lt.s32.totalorder %s19, 0
      %s186 = scalar_select %p185, %s19, 0
      %s187 = sadd.s32 %s186, %s184
      %s188 = smul.addr %s187, 2
      %s189 = scalar_lea.vmem %s0, %s188
      %p190 = scmp.lt.s32.totalorder %s18, 1
      %s191 = scalar_select %p190, %s18, 1
      %p192 = scmp.lt.s32.totalorder %s19, 0
      %s193 = scalar_select %p192, %s19, 0
      %s194 = sadd.s32 %s193, %s191
      %s195 = smul.addr %s194, 8
      %s196 = scalar_lea.vmem %s3, %s195
      %v198 = vld [vmem:[%s1] sm:$0x7]
      %v199 = vld [vmem:[%s189] sm:$0x3]
      %v200 = vld [vmem:[%s2] sm:$0x1f]
      %202 = vset.pattern.permute.xlu0 0
      %203 = vperm.xlu0 %202, %v200
      %v204 = vpop.permute.xlu0 %203
      %vm206 = vcmask 261120
      %v208 = vsel %vm206, %v198, 0
      %v211 = vsel %vm206, %v199, 0
      %213 = vmatprep.subr.bf16.mxu0 0
      %214 = vmatpush1.bf16.xpose.msra.mxu0 %v211
      %215 = vmatprep.subr.bf16.mxu0 0
      %216 = vmatpush1.bf16.xpose.msra.mxu0 0
      %217 = vmatprep.subr.bf16.mxu0 0
      %218 = vmatpush1.bf16.xpose.msra.mxu0 0
      %219 = vmatprep.subr.bf16.mxu0 0
      %220 = vmatpush1.bf16.xpose.msra.mxu0 0
      %221 = vmatprep.subr.bf16.mxu0 0
      %222 = vmatpush1.bf16.xpose.msra.mxu0 0
      %223 = vmatprep.subr.bf16.mxu0 0
      %224 = vmatpush1.bf16.xpose.msra.mxu0 0
      %225 = vmatprep.subr.bf16.mxu0 0
      %226 = vmatpush1.bf16.xpose.msra.mxu0 0
      %227 = vmatprep.subr.bf16.mxu0 0
      %228 = vmatpush1.bf16.xpose.msra.mxu0 0
      %229 = vmatprep.subr.bf16.mxu0 0
      %230 = vmatpush1.bf16.xpose.msra.mxu0 0
      %231 = vmatprep.subr.bf16.mxu0 0
      %232 = vmatpush1.bf16.xpose.msra.mxu0 0
      %233 = vmatprep.subr.bf16.mxu0 0
      %234 = vmatpush1.bf16.xpose.msra.mxu0 0
      %235 = vmatprep.subr.bf16.mxu0 0
      %236 = vmatpush1.bf16.xpose.msra.mxu0 0
      %237 = vmatprep.subr.bf16.mxu0 0
      %238 = vmatpush1.bf16.xpose.msra.mxu0 0
      %239 = vmatprep.subr.bf16.mxu0 0
      %240 = vmatpush1.bf16.xpose.msra.mxu0 0
      %241 = vmatprep.subr.bf16.mxu0 0
      %242 = vmatpush1.bf16.xpose.msra.mxu0 0
      %243 = vmatprep.subr.bf16.mxu0 0
      %244 = vmatpush1.bf16.xpose.msra.mxu0 0
      %245 = vmatprep.mubr.bf16.mxu0 0
      %246 = vmatmul.mubr.bf16.gmra.mrb[0].mxu0 %v208
      %v247 = vpop.f32.mrb[0].mxu0
      %v248 = vadd.f32 %v204, %v247
      %v249 = vpop.f32.mrb[0].mxu0
      %v250 = vpop.f32.mrb[0].mxu0
      %v251 = vpop.f32.mrb[0].mxu0
      %252 = vdwg.mxu0
      %vm253 = vcmask 28672
      %254 = vst.msk [vmem:[%s196] sm:$0x1f] %vm253, %v248
      %p255 = scmp.lt.s32.totalorder %s18, 1
      %s256 = scalar_select %p255, %s18, 1
      %p257 = scmp.lt.s32.totalorder %s19, 0
      %s258 = scalar_select %p257, %s19, 0
      %s259 = sadd.s32 %s258, %s256
      %s260 = smul.addr %s259, 8
      %s261 = scalar_lea.vmem %s3, %s260
      // Predicated region
      $region33: #{segmenter_forward.4} parent=31 // pred_check
        %p262 = pneg %p116
      $region34: #{segmenter_forward.4} parent=31 // pred_check_branch
        %264 = sbr.rel (%p262) target = $region36
      $region35: #{segmenter_forward.4} parent=31 // pred_region
        _
      $region36: #{segmenter_forward.4} parent=31 // pred_fallthru
        _
    $region32: #{segmenter_forward.4} parent=5 // pred_fallthru
      _
    %p265 = scmp.le.s32.totalorder 2, %s9
    // Predicated region
    $region37: #{segmenter_forward.4} parent=5 // pred_check
      %p266 = pneg %p265
    $region38: #{segmenter_forward.4} parent=5 // pred_check_branch
      %268 = sbr.rel (%p266) target = $region40
    $region39: #{segmenter_forward.4} parent=5 // pred_region
      %s269 = ssub.s32 %s9, 2
      // Predicated region
      $region41: #{segmenter_forward.4} parent=39 // pred_check
        %p270 = pneg %p122
      $region42: #{segmenter_forward.4} parent=39 // pred_check_branch
        %272 = sbr.rel (%p270) target = $region44
      $region43: #{segmenter_forward.4} parent=39 // pred_region
        %p273 = scmp.lt.s32.totalorder %s20, 1
        %s274 = scalar_select %p273, %s20, 1
        %p275 = scmp.lt.s32.totalorder %s21, 0
        %s276 = scalar_select %p275, %s21, 0
        %s277 = sadd.s32 %s276, %s274
        %s278 = smul.addr %s277, 8
        %s279 = scalar_lea.vmem %s3, %s278
      $region44: #{segmenter_forward.4} parent=39 // pred_fallthru
        _
    $region40: #{segmenter_forward.4} parent=5 // pred_fallthru
      _
  $region6: #{segmenter_forward.4} parent=0 // loop_footer
    %s13 = sadd.s32 1, %s9
  $region7: #{segmenter_forward.4} parent=0 // loop_footer_branch
    %8 = sbr.rel target = $region3
  $region8: #{segmenter_forward.4} parent=0 // loop_exit
    _

// kernel: segmenter_forward.5
$region0: #{segmenter_forward.5}
  #allocation0 [shape = 'u32[]', space=smem, size = 0x4, offset = 0x4, fixed_abs, tag = 'smem constant byte address 0x4 - core index']
  #allocation1 [shape = 'u32[144,128]{1,0:T(1,128)}', space=vmem, size = 0x12000, scoped, tag = 'internal scratch']
  %s0 = inlined_call_operand.vmem [shape: f32[10,2,2], index: 0, kind: input, shape index: {}]
  %s1 = inlined_call_operand.vmem [shape: f32[13,2], index: 1, kind: input, shape index: {}]
  %s2 = inlined_call_operand.vmem [shape: f32[2,13], index: 2, kind: input, shape index: {}]
  %s3 = inlined_call_operand.vmem [shape: f32[10,13,13], index: 3, kind: output, shape index: {}]
  %s4 = sld [smem:[#allocation0]]
  $region45: #{segmenter_forward.5} parent=0
    _
  %s6 = ssub.s32 1, %s4
  %s7 = scalar_select 0, %s6, %s4
  loop: start=0, step=1, limit=4
  $region2: #{segmenter_forward.5} parent=0 // loop_pre_header
    _
  $region3: #{segmenter_forward.5} parent=0 // loop_header
    %s9 = sphi 0, %s13
    %p10 = scmp.ge.s32.totalorder %s9, 4
    %s19 = sphi 0, %s21
    %s22 = sphi 0, %s19
    %s23 = sphi 0, %s22
    %s39 = sphi 0, %s23
    %s43 = sphi 0, %s43
    %s45 = sphi 0, %s43
    %s46 = sphi 0, %s45
    %s60 = sphi 0, %s46
    %s64 = sphi 0, %s64
    %s66 = sphi 0, %s64
    %s67 = sphi 0, %s66
    %s81 = sphi 0, %s67
    %s87 = sphi 0, %s89
    %s90 = sphi 0, %s87
    %s91 = sphi 0, %s90
    %s107 = sphi 0, %s91
  $region4: #{segmenter_forward.5} parent=0 // loop_header_branch
    %12 = sbr.rel (%p10) target = $region8
  $region5: #{segmenter_forward.5} parent=0 // loop_body
    %s14 = ssub.s32 %s9, 1
    %s15 = ssub.s32 %s9, 2
    %s16 = sadd.s32 %s9, 1
    %s17 = ssub.s32 %s9, %s16
    %p18 = scmp.eq.s32.totalorder %s17, 0
    %s20 = sadd.s32 %s19, 1
    %s21 = scalar_select %p18, %s19, %s20
    %p24 = pneg %p18
    %p25 = scmp.eq.s32.totalorder %s9, 1
    %p26 = por %p24, %p25
    %p27 = scmp.ne.s32.totalorder %s19, %s22
    %p28 = scmp.eq.s32.totalorder %s9, 0
    %p29 = por %p27, %p28
    %p30 = scmp.ne.s32.totalorder %s19, %s22
    %p31 = scmp.eq.s32.totalorder %s14, 1
    %p32 = por %p30, %p31
    %p33 = scmp.ne.s32.totalorder %s22, %s23
    %p34 = scmp.eq.s32.totalorder %s14, 0
    %p35 = por %p33, %p34
    %p36 = scmp.ne.s32.totalorder %s22, %s23
    %p37 = scmp.eq.s32.totalorder %s15, 1
    %p38 = por %p36, %p37
    %p40 = scmp.ne.s32.totalorder %s23, %s39
    %p41 = scmp.eq.s32.totalorder %s15, 0
    %p42 = por %p40, %p41
    %s44 = sadd.s32 %s43, 1
    %p47 = scmp.eq.s32.totalorder %s9, 1
    %p48 = scmp.ne.s32.totalorder %s43, %s45
    %p49 = scmp.eq.s32.totalorder %s9, 0
    %p50 = por %p48, %p49
    %p51 = scmp.ne.s32.totalorder %s43, %s45
    %p52 = scmp.eq.s32.totalorder %s14, 1
    %p53 = por %p51, %p52
    %p54 = scmp.ne.s32.totalorder %s45, %s46
    %p55 = scmp.eq.s32.totalorder %s14, 0
    %p56 = por %p54, %p55
    %p57 = scmp.ne.s32.totalorder %s45, %s46
    %p58 = scmp.eq.s32.totalorder %s15, 1
    %p59 = por %p57, %p58
    %p61 = scmp.ne.s32.totalorder %s46, %s60
    %p62 = scmp.eq.s32.totalorder %s15, 0
    %p63 = por %p61, %p62
    %s65 = sadd.s32 %s64, 1
    %p68 = scmp.eq.s32.totalorder %s9, 1
    %p69 = scmp.ne.s32.totalorder %s64, %s66
    %p70 = scmp.eq.s32.totalorder %s9, 0
    %p71 = por %p69, %p70
    %p72 = scmp.ne.s32.totalorder %s64, %s66
    %p73 = scmp.eq.s32.totalorder %s14, 1
    %p74 = por %p72, %p73
    %p75 = scmp.ne.s32.totalorder %s66, %s67
    %p76 = scmp.eq.s32.totalorder %s14, 0
    %p77 = por %p75, %p76
    %p78 = scmp.ne.s32.totalorder %s66, %s67
    %p79 = scmp.eq.s32.totalorder %s15, 1
    %p80 = por %p78, %p79
    %p82 = scmp.ne.s32.totalorder %s67, %s81
    %p83 = scmp.eq.s32.totalorder %s15, 0
    %p84 = por %p82, %p83
    %s85 = ssub.s32 %s9, %s16
    %p86 = scmp.eq.s32.totalorder %s85, 0
    %s88 = sadd.s32 %s87, 1
    %s89 = scalar_select %p86, %s87, %s88
    %p92 = pneg %p86
    %p93 = scmp.eq.s32.totalorder %s9, 1
    %p94 = por %p92, %p93
    %p95 = scmp.ne.s32.totalorder %s87, %s90
    %p96 = scmp.eq.s32.totalorder %s9, 0
    %p97 = por %p95, %p96
    %p98 = scmp.ne.s32.totalorder %s87, %s90
    %p99 = scmp.eq.s32.totalorder %s14, 1
    %p100 = por %p98, %p99
    %p101 = scmp.ne.s32.totalorder %s90, %s91
    %p102 = scmp.eq.s32.totalorder %s14, 0
    %p103 = por %p101, %p102
    %p104 = scmp.ne.s32.totalorder %s90, %s91
    %p105 = scmp.eq.s32.totalorder %s15, 1
    %p106 = por %p104, %p105
    %p108 = scmp.ne.s32.totalorder %s91, %s107
    %p109 = scmp.eq.s32.totalorder %s15, 0
    %p110 = por %p108, %p109
    %p111 = scmp.le.s32.totalorder 1, %s9
    %p112 = scmp.lt.s32.totalorder %s9, 3
    %p113 = pnand %p111, %p112
    %p114 = pneg %p113
    // Predicated region
    $region9: #{segmenter_forward.5} parent=5 // pred_check
      _
    $region10: #{segmenter_forward.5} parent=5 // pred_check_branch
      %116 = sbr.rel (%p113) target = $region12
    $region11: #{segmenter_forward.5} parent=5 // pred_region
      %s117 = ssub.s32 %s9, 1
      // Predicated region
      $region13: #{segmenter_forward.5} parent=11 // pred_check
        %p118 = pneg %p56
      $region14: #{segmenter_forward.5} parent=11 // pred_check_branch
        %120 = sbr.rel (%p118) target = $region16
      $region15: #{segmenter_forward.5} parent=11 // pred_region
        _
      $region16: #{segmenter_forward.5} parent=11 // pred_fallthru
        _
      // Predicated region
      $region17: #{segmenter_forward.5} parent=11 // pred_check
        %p121 = pneg %p77
      $region18: #{segmenter_forward.5} parent=11 // pred_check_branch
        %123 = sbr.rel (%p121) target = $region20
      $region19: #{segmenter_forward.5} parent=11 // pred_region
        _
      $region20: #{segmenter_forward.5} parent=11 // pred_fallthru
        _
    $region12: #{segmenter_forward.5} parent=5 // pred_fallthru
      _
    %p124 = scmp.lt.s32.totalorder %s9, 2
    // Predicated region
    $region21: #{segmenter_forward.5} parent=5 // pred_check
      %p125 = pneg %p124
    $region22: #{segmenter_forward.5} parent=5 // pred_check_branch
      %127 = sbr.rel (%p125) target = $region24
    $region23: #{segmenter_forward.5} parent=5 // pred_region
      // Predicated region
      $region25: #{segmenter_forward.5} parent=23 // pred_check
        %p128 = pneg %p29
      $region26: #{segmenter_forward.5} parent=23 // pred_check_branch
        %130 = sbr.rel (%p128) target = $region28
      $region27: #{segmenter_forward.5} parent=23 // pred_region
        %s131 = smul.u32 5, %s9
        %p132 = scmp.lt.s32.totalorder %s131, 9
        %s133 = scalar_select %p132, %s131, 9
        %s134 = smul.addr %s133, 2
        %s135 = scalar_lea.vmem %s0, %s134
        %s136 = smul.u32 5, %s9
      $region28: #{segmenter_forward.5} parent=23 // pred_fallthru
        _
    $region24: #{segmenter_forward.5} parent=5 // pred_fallthru
      _
    %p137 = scmp.le.s32.totalorder 1, %s9
    %p138 = scmp.lt.s32.totalorder %s9, 3
    %p139 = pnand %p137, %p138
    %p140 = pneg %p139
    // Predicated region
    $region29: #{segmenter_forward.5} parent=5 // pred_check
      _
    $region30: #{segmenter_forward.5} parent=5 // pred_check_branch
      %142 = sbr.rel (%p139) target = $region32
    $region31: #{segmenter_forward.5} parent=5 // pred_region
      %s143 = ssub.s32 %s9, 1
      %s144 = smul.u32 5, %s14
      %p145 = scmp.lt.s32.totalorder %s144, 9
      %s146 = scalar_select %p145, %s144, 9
      %s147 = smul.addr %s146, 2
      %s148 = scalar_lea.vmem %s0, %s147
      %p149 = pneg %p35
      %p150 = pneg %p32
      %p151 = pneg %p56
      %p152 = pneg %p53
      %p153 = pneg %p77
      %p154 = pneg %p74
      %p155 = pneg %p103
      %p156 = pneg %p100
      %s157 = smul.u32 5, %s14
      %p158 = scmp.lt.s32.totalorder %s157, 9
      %s159 = scalar_select %p158, %s157, 9
      %s160 = smul.addr %s159, 2
      %s161 = smul.addr %s160, 8
      %s162 = scalar_lea.vmem %s3, %s161
      %s163 = smul.u32 5, %s14
      %p164 = scmp.lt.s32.totalorder %s163, 9
      %s165 = scalar_select %p164, %s163, 9
      %s166 = smul.addr %s165, 2
      %s167 = scalar_lea.vmem %s0, %s166
      %s168 = smul.u32 5, %s14
      %s169 = smul.u32 5, %s14
      %p170 = scmp.lt.s32.totalorder %s169, 9
      %s171 = scalar_select %p170, %s169, 9
      %s172 = smul.addr %s171, 2
      %s173 = smul.addr %s172, 8
      %s174 = scalar_lea.vmem %s3, %s173
      %s175 = smul.u32 5, %s14
      %v176 = vld [vmem:[%s1] sm:$0xff]
      %v177 = vld [vmem:[%s1 + $0x8] sm:$0x1f]
      %v178 = vld [vmem:[%s2] sm:$0x3]
      %v179 = vld [vmem:[%s167] sm:$0x3]
      %vm180 = vcmask 15360
      %v182 = vsel %vm180, %v179, 0
      %vm184 = vcmask 1041408
      %v186 = vsel %vm184, %v178, 0
      %188 = vmatprep.subr.mxu0 0.0
      %189 = vmatpush1.msra.mxu0 %v186
      %190 = vmatprep.subr.mxu0 0.0
      %191 = vmatpush1.msra.mxu0 0.0
      %192 = vmatprep.subr.mxu0 0.0
      %193 = vmatpush1.msra.mxu0 0.0
      %194 = vmatprep.subr.mxu0 0.0
      %195 = vmatpush1.msra.mxu0 0.0
      %196 = vmatprep.subr.mxu0 0.0
      %197 = vmatpush1.msra.mxu0 0.0
      %198 = vmatprep.subr.mxu0 0.0
      %199 = vmatpush1.msra.mxu0 0.0
      %200 = vmatprep.subr.mxu0 0.0
      %201 = vmatpush1.msra.mxu0 0.0
      %202 = vmatprep.subr.mxu0 0.0
      %203 = vmatpush1.msra.mxu0 0.0
      %204 = vmatprep.subr.mxu0 0.0
      %205 = vmatpush1.msra.mxu0 0.0
      %206 = vmatprep.subr.mxu0 0.0
      %207 = vmatpush1.msra.mxu0 0.0
      %208 = vmatprep.subr.mxu0 0.0
      %209 = vmatpush1.msra.mxu0 0.0
      %210 = vmatprep.subr.mxu0 0.0
      %211 = vmatpush1.msra.mxu0 0.0
      %212 = vmatprep.subr.mxu0 0.0
      %213 = vmatpush1.msra.mxu0 0.0
      %214 = vmatprep.subr.mxu0 0.0
      %215 = vmatpush1.msra.mxu0 0.0
      %216 = vmatprep.subr.mxu0 0.0
      %217 = vmatpush1.msra.mxu0 0.0
      %218 = vmatprep.subr.mxu0 0.0
      %219 = vmatpush1.msra.mxu0 0.0
      %220 = vmatprep.subr.mxu0 0.0
      %221 = vmatpush1.msra.mxu0 0.0
      %222 = vmatprep.subr.mxu0 0.0
      %223 = vmatpush1.msra.mxu0 0.0
      %224 = vmatprep.subr.mxu0 0.0
      %225 = vmatpush1.msra.mxu0 0.0
      %226 = vmatprep.subr.mxu0 0.0
      %227 = vmatpush1.msra.mxu0 0.0
      %228 = vmatprep.subr.mxu0 0.0
      %229 = vmatpush1.msra.mxu0 0.0
      %230 = vmatprep.subr.mxu0 0.0
      %231 = vmatpush1.msra.mxu0 0.0
      %232 = vmatprep.subr.mxu0 0.0
      %233 = vmatpush1.msra.mxu0 0.0
      %234 = vmatprep.subr.mxu0 0.0
      %235 = vmatpush1.msra.mxu0 0.0
      %236 = vmatprep.subr.mxu0 0.0
      %237 = vmatpush1.msra.mxu0 0.0
      %238 = vmatprep.subr.mxu0 0.0
      %239 = vmatpush1.msra.mxu0 0.0
      %240 = vmatprep.subr.mxu0 0.0
      %241 = vmatpush1.msra.mxu0 0.0
      %242 = vmatprep.subr.mxu0 0.0
      %243 = vmatpush1.msra.mxu0 0.0
      %244 = vmatprep.subr.mxu0 0.0
      %245 = vmatpush1.msra.mxu0 0.0
      %246 = vmatprep.subr.mxu0 0.0
      %247 = vmatpush1.msra.mxu0 0.0
      %248 = vmatprep.subr.mxu0 0.0
      %249 = vmatpush1.msra.mxu0 0.0
      %250 = vmatprep.subr.mxu0 0.0
      %251 = vmatpush1.msra.mxu0 0.0
      %252 = vmatprep.mubr.f32.mxu0 0.0
      %253 = vmatmul.mubr.f32.gmra.mrb[0].mxu0 %v182
      %v254 = vpop.f32.mrb[0].mxu0
      %v255 = vadd.f32 0.0, %v254
      %v256 = vpop.f32.mrb[0].mxu0
      %257 = vdwg.mxu0
      %v259 = vsel %vm180, %v176, 0
      %v262 = vsel %vm180, %v177, 0
      %v265 = vsel %vm184, %v255, 0
      %267 = vmatprep.subr.mxu0 0.0
      %268 = vmatpush1.msra.mxu0 %v265
      %269 = vmatprep.subr.mxu0 0.0
      %270 = vmatpush1.msra.mxu0 0.0
      %271 = vmatprep.subr.mxu0 0.0
      %272 = vmatpush1.msra.mxu0 0.0
      %273 = vmatprep.subr.mxu0 0.0
      %274 = vmatpush1.msra.mxu0 0.0
      %275 = vmatprep.subr.mxu0 0.0
      %276 = vmatpush1.msra.mxu0 0.0
      %277 = vmatprep.subr.mxu0 0.0
      %278 = vmatpush1.msra.mxu0 0.0
      %279 = vmatprep.subr.mxu0 0.0
      %280 = vmatpush1.msra.mxu0 0.0
      %281 = vmatprep.subr.mxu0 0.0
      %282 = vmatpush1.msra.mxu0 0.0
      %283 = vmatprep.subr.mxu0 0.0
      %284 = vmatpush1.msra.mxu0 0.0
      %285 = vmatprep.subr.mxu0 0.0
      %286 = vmatpush1.msra.mxu0 0.0
      %287 = vmatprep.subr.mxu0 0.0
      %288 = vmatpush1.msra.mxu0 0.0
      %289 = vmatprep.subr.mxu0 0.0
      %290 = vmatpush1.msra.mxu0 0.0
      %291 = vmatprep.subr.mxu0 0.0
      %292 = vmatpush1.msra.mxu0 0.0
      %293 = vmatprep.subr.mxu0 0.0
      %294 = vmatpush1.msra.mxu0 0.0
      %295 = vmatprep.subr.mxu0 0.0
      %296 = vmatpush1.msra.mxu0 0.0
      %297 = vmatprep.subr.mxu0 0.0
      %298 = vmatpush1.msra.mxu0 0.0
      %299 = vmatprep.subr.mxu0 0.0
      %300 = vmatpush1.msra.mxu0 0.0
      %301 = vmatprep.subr.mxu0 0.0
      %302 = vmatpush1.msra.mxu0 0.0
      %303 = vmatprep.subr.mxu0 0.0
      %304 = vmatpush1.msra.mxu0 0.0
      %305 = vmatprep.subr.mxu0 0.0
      %306 = vmatpush1.msra.mxu0 0.0
      %307 = vmatprep.subr.mxu0 0.0
      %308 = vmatpush1.msra.mxu0 0.0
      %309 = vmatprep.subr.mxu0 0.0
      %310 = vmatpush1.msra.mxu0 0.0
      %311 = vmatprep.subr.mxu0 0.0
      %312 = vmatpush1.msra.mxu0 0.0
      %313 = vmatprep.subr.mxu0 0.0
      %314 = vmatpush1.msra.mxu0 0.0
      %315 = vmatprep.subr.mxu0 0.0
      %316 = vmatpush1.msra.mxu0 0.0
      %317 = vmatprep.subr.mxu0 0.0
      %318 = vmatpush1.msra.mxu0 0.0
      %319 = vmatprep.subr.mxu0 0.0
      %320 = vmatpush1.msra.mxu0 0.0
      %321 = vmatprep.subr.mxu0 0.0
      %322 = vmatpush1.msra.mxu0 0.0
      %323 = vmatprep.subr.mxu0 0.0
      %324 = vmatpush1.msra.mxu0 0.0
      %325 = vmatprep.subr.mxu0 0.0
      %326 = vmatpush1.msra.mxu0 0.0
      %327 = vmatprep.subr.mxu0 0.0
      %328 = vmatpush1.msra.mxu0 0.0
      %329 = vmatprep.subr.mxu0 0.0
      %330 = vmatpush1.msra.mxu0 0.0
      %331 = vmatprep.mubr.f32.mxu0 0.0
      %332 = vmatmul.mubr.f32.gmra.mrb[0].mxu0 %v259
      %v333 = vpop.f32.mrb[0].mxu0
      %v334 = vadd.f32 0.0, %v333
      %v335 = vpop.f32.mrb[0].mxu0
      %336 = vmatprep.mubr.f32.mxu0 0.0
      %337 = vmatmul.mubr.f32.gmra.mrb[0].mxu0 %v262
      %v338 = vpop.f32.mrb[0].mxu0
      %v339 = vadd.f32 0.0, %v338
      %v340 = vpop.f32.mrb[0].mxu0
      %341 = vdwg.mxu0
      %vm342 = vcmask 105472
      %343 = vst.msk [vmem:[%s174] sm:$0xff] %vm342, %v334
      %vm344 = vcmask 102400
      %345 = vst.msk [vmem:[%s174 + $0x8] sm:$0x1f] %vm344, %v339
      %s346 = scalar_lea.vmem %s167, 2
      %v347 = vld [vmem:[%s346] sm:$0x3]
      %v349 = vsel %vm180, %v347, 0
      %351 = vmatprep.subr.mxu0 0.0
      %352 = vmatpush1.msra.mxu0 %v186
      %353 = vmatprep.subr.mxu0 0.0
      %354 = vmatpush1.msra.mxu0 0.0
      %355 = vmatprep.subr.mxu0 0.0
      %356 = vmatpush1.msra.mxu0 0.0
      %357 = vmatprep.subr.mxu0 0.0
      %358 = vmatpush1.msra.mxu0 0.0
      %359 = vmatprep.subr.mxu0 0.0
      %360 = vmatpush1.msra.mxu0 0.0
      %361 = vmatprep.subr.mxu0 0.0
      %362 = vmatpush1.msra.mxu0 0.0
      %363 = vmatprep.subr.mxu0 0.0
      %364 = vmatpush1.msra.mxu0 0.0
      %365 = vmatprep.subr.mxu0 0.0
      %366 = vmatpush1.msra.mxu0 0.0
      %367 = vmatprep.subr.mxu0 0.0
      %368 = vmatpush1.msra.mxu0 0.0
      %369 = vmatprep.subr.mxu0 0.0
      %370 = vmatpush1.msra.mxu0 0.0
      %371 = vmatprep.subr.mxu0 0.0
      %372 = vmatpush1.msra.mxu0 0.0
      %373 = vmatprep.subr.mxu0 0.0
      %374 = vmatpush1.msra.mxu0 0.0
      %375 = vmatprep.subr.mxu0 0.0
      %376 = vmatpush1.msra.mxu0 0.0
      %377 = vmatprep.subr.mxu0 0.0
      %378 = vmatpush1.msra.mxu0 0.0
      %379 = vmatprep.subr.mxu0 0.0
      %380 = vmatpush1.msra.mxu0 0.0
      %381 = vmatprep.subr.mxu0 0.0
      %382 = vmatpush1.msra.mxu0 0.0
      %383 = vmatprep.subr.mxu0 0.0
      %384 = vmatpush1.msra.mxu0 0.0
      %385 = vmatprep.subr.mxu0 0.0
      %386 = vmatpush1.msra.mxu0 0.0
      %387 = vmatprep.subr.mxu0 0.0
      %388 = vmatpush1.msra.mxu0 0.0
      %389 = vmatprep.subr.mxu0 0.0
      %390 = vmatpush1.msra.mxu0 0.0
      %391 = vmatprep.subr.mxu0 0.0
      %392 = vmatpush1.msra.mxu0 0.0
      %393 = vmatprep.subr.mxu0 0.0
      %394 = vmatpush1.msra.mxu0 0.0
      %395 = vmatprep.subr.mxu0 0.0
      %396 = vmatpush1.msra.mxu0 0.0
      %397 = vmatprep.subr.mxu0 0.0
      %398 = vmatpush1.msra.mxu0 0.0
      %399 = vmatprep.subr.mxu0 0.0
      %400 = vmatpush1.msra.mxu0 0.0
      %401 = vmatprep.subr.mxu0 0.0
      %402 = vmatpush1.msra.mxu0 0.0
      %403 = vmatprep.subr.mxu0 0.0
      %404 = vmatpush1.msra.mxu0 0.0
      %405 = vmatprep.subr.mxu0 0.0
      %406 = vmatpush1.msra.mxu0 0.0
      %407 = vmatprep.subr.mxu0 0.0
      %408 = vmatpush1.msra.mxu0 0.0
      %409 = vmatprep.subr.mxu0 0.0
      %410 = vmatpush1.msra.mxu0 0.0
      %411 = vmatprep.subr.mxu0 0.0
      %412 = vmatpush1.msra.mxu0 0.0
      %413 = vmatprep.subr.mxu0 0.0
      %414 = vmatpush1.msra.mxu0 0.0
      %415 = vmatprep.mubr.f32.mxu0 0.0
      %416 = vmatmul.mubr.f32.gmra.mrb[0].mxu0 %v349
      %v417 = vpop.f32.mrb[0].mxu0
      %v418 = vadd.f32 0.0, %v417
      %v419 = vpop.f32.mrb[0].mxu0
      %420 = vdwg.mxu0
      %v422 = vsel %vm184, %v418, 0
      %424 = vmatprep.subr.mxu0 0.0
      %425 = vmatpush1.msra.mxu0 %v422
      %426 = vmatprep.subr.mxu0 0.0
      %427 = vmatpush1.msra.mxu0 0.0
      %428 = vmatprep.subr.mxu0 0.0
      %429 = vmatpush1.msra.mxu0 0.0
      %430 = vmatprep.subr.mxu0 0.0
      %431 = vmatpush1.msra.mxu0 0.0
      %432 = vmatprep.subr.mxu0 0.0
      %433 = vmatpush1.msra.mxu0 0.0
      %434 = vmatprep.subr.mxu0 0.0
      %435 = vmatpush1.msra.mxu0 0.0
      %436 = vmatprep.subr.mxu0 0.0
      %437 = vmatpush1.msra.mxu0 0.0
      %438 = vmatprep.subr.mxu0 0.0
      %439 = vmatpush1.msra.mxu0 0.0
      %440 = vmatprep.subr.mxu0 0.0
      %441 = vmatpush1.msra.mxu0 0.0
      %442 = vmatprep.subr.mxu0 0.0
      %443 = vmatpush1.msra.mxu0 0.0
      %444 = vmatprep.subr.mxu0 0.0
      %445 = vmatpush1.msra.mxu0 0.0
      %446 = vmatprep.subr.mxu0 0.0
      %447 = vmatpush1.msra.mxu0 0.0
      %448 = vmatprep.subr.mxu0 0.0
      %449 = vmatpush1.msra.mxu0 0.0
      %450 = vmatprep.subr.mxu0 0.0
      %451 = vmatpush1.msra.mxu0 0.0
      %452 = vmatprep.subr.mxu0 0.0
      %453 = vmatpush1.msra.mxu0 0.0
      %454 = vmatprep.subr.mxu0 0.0
      %455 = vmatpush1.msra.mxu0 0.0
      %456 = vmatprep.subr.mxu0 0.0
      %457 = vmatpush1.msra.mxu0 0.0
      %458 = vmatprep.subr.mxu0 0.0
      %459 = vmatpush1.msra.mxu0 0.0
      %460 = vmatprep.subr.mxu0 0.0
      %461 = vmatpush1.msra.mxu0 0.0
      %462 = vmatprep.subr.mxu0 0.0
      %463 = vmatpush1.msra.mxu0 0.0
      %464 = vmatprep.subr.mxu0 0.0
      %465 = vmatpush1.msra.mxu0 0.0
      %466 = vmatprep.subr.mxu0 0.0
      %467 = vmatpush1.msra.mxu0 0.0
      %468 = vmatprep.subr.mxu0 0.0
      %469 = vmatpush1.msra.mxu0 0.0
      %470 = vmatprep.subr.mxu0 0.0
      %471 = vmatpush1.msra.mxu0 0.0
      %472 = vmatprep.subr.mxu0 0.0
      %473 = vmatpush1.msra.mxu0 0.0
      %474 = vmatprep.subr.mxu0 0.0
      %475 = vmatpush1.msra.mxu0 0.0
      %476 = vmatprep.subr.mxu0 0.0
      %477 = vmatpush1.msra.mxu0 0.0
      %478 = vmatprep.subr.mxu0 0.0
      %479 = vmatpush1.msra.mxu0 0.0
      %480 = vmatprep.subr.mxu0 0.0
      %481 = vmatpush1.msra.mxu0 0.0
      %482 = vmatprep.subr.mxu0 0.0
      %483 = vmatpush1.msra.mxu0 0.0
      %484 = vmatprep.subr.mxu0 0.0
      %485 = vmatpush1.msra.mxu0 0.0
      %486 = vmatprep.subr.mxu0 0.0
      %487 = vmatpush1.msra.mxu0 0.0
      %488 = vmatprep.mubr.f32.mxu0 0.0
      %489 = vmatmul.mubr.f32.gmra.mrb[0].mxu0 %v259
      %v490 = vpop.f32.mrb[0].mxu0
      %v491 = vadd.f32 0.0, %v490
      %v492 = vpop.f32.mrb[0].mxu0
      %493 = vmatprep.mubr.f32.mxu0 0.0
      %494 = vmatmul.mubr.f32.gmra.mrb[0].mxu0 %v262
      %v495 = vpop.f32.mrb[0].mxu0
      %v496 = vadd.f32 0.0, %v495
      %v497 = vpop.f32.mrb[0].mxu0
      %498 = vdwg.mxu0
      %s499 = scalar_lea.vmem %s174, 16
      %500 = vst.msk [vmem:[%s499] sm:$0xff] %vm342, %v491
      %501 = vst.msk [vmem:[%s499 + $0x8] sm:$0x1f] %vm344, %v496
      %s502 = scalar_lea.vmem %s167, 4
      %v503 = vld [vmem:[%s502] sm:$0x3]
      %v505 = vsel %vm180, %v503, 0
      %507 = vmatprep.subr.mxu0 0.0
      %508 = vmatpush1.msra.mxu0 %v186
      %509 = vmatprep.subr.mxu0 0.0
      %510 = vmatpush1.msra.mxu0 0.0
      %511 = vmatprep.subr.mxu0 0.0
      %512 = vmatpush1.msra.mxu0 0.0
      %513 = vmatprep.subr.mxu0 0.0
      %514 = vmatpush1.msra.mxu0 0.0
      %515 = vmatprep.subr.mxu0 0.0
      %516 = vmatpush1.msra.mxu0 0.0
      %517 = vmatprep.subr.mxu0 0.0
      %518 = vmatpush1.msra.mxu0 0.0
      %519 = vmatprep.subr.mxu0 0.0
      %520 = vmatpush1.msra.mxu0 0.0
      %521 = vmatprep.subr.mxu0 0.0
      %522 = vmatpush1.msra.mxu0 0.0
      %523 = vmatprep.subr.mxu0 0.0
      %524 = vmatpush1.msra.mxu0 0.0
      %525 = vmatprep.subr.mxu0 0.0
      %526 = vmatpush1.msra.mxu0 0.0
      %527 = vmatprep.subr.mxu0 0.0
      %528 = vmatpush1.msra.mxu0 0.0
      %529 = vmatprep.subr.mxu0 0.0
      %530 = vmatpush1.msra.mxu0 0.0
      %531 = vmatprep.subr.mxu0 0.0
      %532 = vmatpush1.msra.mxu0 0.0
      %533 = vmatprep.subr.mxu0 0.0
      %534 = vmatpush1.msra.mxu0 0.0
      %535 = vmatprep.subr.mxu0 0.0
      %536 = vmatpush1.msra.mxu0 0.0
      %537 = vmatprep.subr.mxu0 0.0
      %538 = vmatpush1.msra.mxu0 0.0
      %539 = vmatprep.subr.mxu0 0.0
      %540 = vmatpush1.msra.mxu0 0.0
      %541 = vmatprep.subr.mxu0 0.0
      %542 = vmatpush1.msra.mxu0 0.0
      %543 = vmatprep.subr.mxu0 0.0
      %544 = vmatpush1.msra.mxu0 0.0
      %545 = vmatprep.subr.mxu0 0.0
      %546 = vmatpush1.msra.mxu0 0.0
      %547 = vmatprep.subr.mxu0 0.0
      %548 = vmatpush1.msra.mxu0 0.0
      %549 = vmatprep.subr.mxu0 0.0
      %550 = vmatpush1.msra.mxu0 0.0
      %551 = vmatprep.subr.mxu0 0.0
      %552 = vmatpush1.msra.mxu0 0.0
      %553 = vmatprep.subr.mxu0 0.0
      %554 = vmatpush1.msra.mxu0 0.0
      %555 = vmatprep.subr.mxu0 0.0
      %556 = vmatpush1.msra.mxu0 0.0
      %557 = vmatprep.subr.mxu0 0.0
      %558 = vmatpush1.msra.mxu0 0.0
      %559 = vmatprep.subr.mxu0 0.0
      %560 = vmatpush1.msra.mxu0 0.0
      %561 = vmatprep.subr.mxu0 0.0
      %562 = vmatpush1.msra.mxu0 0.0
      %563 = vmatprep.subr.mxu0 0.0
      %564 = vmatpush1.msra.mxu0 0.0
      %565 = vmatprep.subr.mxu0 0.0
      %566 = vmatpush1.msra.mxu0 0.0
      %567 = vmatprep.subr.mxu0 0.0
      %568 = vmatpush1.msra.mxu0 0.0
      %569 = vmatprep.subr.mxu0 0.0
      %570 = vmatpush1.msra.mxu0 0.0
      %571 = vmatprep.mubr.f32.mxu0 0.0
      %572 = vmatmul.mubr.f32.gmra.mrb[0].mxu0 %v505
      %v573 = vpop.f32.mrb[0].mxu0
      %v574 = vadd.f32 0.0, %v573
      %v575 = vpop.f32.mrb[0].mxu0
      %576 = vdwg.mxu0
      %v578 = vsel %vm184, %v574, 0
      %580 = vmatprep.subr.mxu0 0.0
      %581 = vmatpush1.msra.mxu0 %v578
      %582 = vmatprep.subr.mxu0 0.0
      %583 = vmatpush1.msra.mxu0 0.0
      %584 = vmatprep.subr.mxu0 0.0
      %585 = vmatpush1.msra.mxu0 0.0
      %586 = vmatprep.subr.mxu0 0.0
      %587 = vmatpush1.msra.mxu0 0.0
      %588 = vmatprep.subr.mxu0 0.0
      %589 = vmatpush1.msra.mxu0 0.0
      %590 = vmatprep.subr.mxu0 0.0
      %591 = vmatpush1.msra.mxu0 0.0
      %592 = vmatprep.subr.mxu0 0.0
      %593 = vmatpush1.msra.mxu0 0.0
      %594 = vmatprep.subr.mxu0 0.0
      %595 = vmatpush1.msra.mxu0 0.0
      %596 = vmatprep.subr.mxu0 0.0
      %597 = vmatpush1.msra.mxu0 0.0
      %598 = vmatprep.subr.mxu0 0.0
      %599 = vmatpush1.msra.mxu0 0.0
      %600 = vmatprep.subr.mxu0 0.0
      %601 = vmatpush1.msra.mxu0 0.0
      %602 = vmatprep.subr.mxu0 0.0
      %603 = vmatpush1.msra.mxu0 0.0
      %604 = vmatprep.subr.mxu0 0.0
      %605 = vmatpush1.msra.mxu0 0.0
      %606 = vmatprep.subr.mxu0 0.0
      %607 = vmatpush1.msra.mxu0 0.0
      %608 = vmatprep.subr.mxu0 0.0
      %609 = vmatpush1.msra.mxu0 0.0
      %610 = vmatprep.subr.mxu0 0.0
      %611 = vmatpush1.msra.mxu0 0.0
      %612 = vmatprep.subr.mxu0 0.0
      %613 = vmatpush1.msra.mxu0 0.0
      %614 = vmatprep.subr.mxu0 0.0
      %615 = vmatpush1.msra.mxu0 0.0
      %616 = vmatprep.subr.mxu0 0.0
      %617 = vmatpush1.msra.mxu0 0.0
      %618 = vmatprep.subr.mxu0 0.0
      %619 = vmatpush1.msra.mxu0 0.0
      %620 = vmatprep.subr.mxu0 0.0
      %621 = vmatpush1.msra.mxu0 0.0
      %622 = vmatprep.subr.mxu0 0.0
      %623 = vmatpush1.msra.mxu0 0.0
      %624 = vmatprep.subr.mxu0 0.0
      %625 = vmatpush1.msra.mxu0 0.0
      %626 = vmatprep.subr.mxu0 0.0
      %627 = vmatpush1.msra.mxu0 0.0
      %628 = vmatprep.subr.mxu0 0.0
      %629 = vmatpush1.msra.mxu0 0.0
      %630 = vmatprep.subr.mxu0 0.0
      %631 = vmatpush1.msra.mxu0 0.0
      %632 = vmatprep.subr.mxu0 0.0
      %633 = vmatpush1.msra.mxu0 0.0
      %634 = vmatprep.subr.mxu0 0.0
      %635 = vmatpush1.msra.mxu0 0.0
      %636 = vmatprep.subr.mxu0 0.0
      %637 = vmatpush1.msra.mxu0 0.0
      %638 = vmatprep.subr.mxu0 0.0
      %639 = vmatpush1.msra.mxu0 0.0
      %640 = vmatprep.subr.mxu0 0.0
      %641 = vmatpush1.msra.mxu0 0.0
      %642 = vmatprep.subr.mxu0 0.0
      %643 = vmatpush1.msra.mxu0 0.0
      %644 = vmatprep.mubr.f32.mxu0 0.0
      %645 = vmatmul.mubr.f32.gmra.mrb[0].mxu0 %v259
      %v646 = vpop.f32.mrb[0].mxu0
      %v647 = vadd.f32 0.0, %v646
      %v648 = vpop.f32.mrb[0].mxu0
      %649 = vmatprep.mubr.f32.mxu0 0.0
      %650 = vmatmul.mubr.f32.gmra.mrb[0].mxu0 %v262
      %v651 = vpop.f32.mrb[0].mxu0
      %v652 = vadd.f32 0.0, %v651
      %v653 = vpop.f32.mrb[0].mxu0
      %654 = vdwg.mxu0
      %s655 = scalar_lea.vmem %s174, 32
      %656 = vst.msk [vmem:[%s655] sm:$0xff] %vm342, %v647
      %657 = vst.msk [vmem:[%s655 + $0x8] sm:$0x1f] %vm344, %v652
      %s658 = scalar_lea.vmem %s167, 6
      %v659 = vld [vmem:[%s658] sm:$0x3]
      %v661 = vsel %vm180, %v659, 0
      %663 = vmatprep.subr.mxu0 0.0
      %664 = vmatpush1.msra.mxu0 %v186
      %665 = vmatprep.subr.mxu0 0.0
      %666 = vmatpush1.msra.mxu0 0.0
      %667 = vmatprep.subr.mxu0 0.0
      %668 = vmatpush1.msra.mxu0 0.0
      %669 = vmatprep.subr.mxu0 0.0
      %670 = vmatpush1.msra.mxu0 0.0
      %671 = vmatprep.subr.mxu0 0.0
      %672 = vmatpush1.msra.mxu0 0.0
      %673 = vmatprep.subr.mxu0 0.0
      %674 = vmatpush1.msra.mxu0 0.0
      %675 = vmatprep.subr.mxu0 0.0
      %676 = vmatpush1.msra.mxu0 0.0
      %677 = vmatprep.subr.mxu0 0.0
      %678 = vmatpush1.msra.mxu0 0.0
      %679 = vmatprep.subr.mxu0 0.0
      %680 = vmatpush1.msra.mxu0 0.0
      %681 = vmatprep.subr.mxu0 0.0
      %682 = vmatpush1.msra.mxu0 0.0
      %683 = vmatprep.subr.mxu0 0.0
      %684 = vmatpush1.msra.mxu0 0.0
      %685 = vmatprep.subr.mxu0 0.0
      %686 = vmatpush1.msra.mxu0 0.0
      %687 = vmatprep.subr.mxu0 0.0
      %688 = vmatpush1.msra.mxu0 0.0
      %689 = vmatprep.subr.mxu0 0.0
      %690 = vmatpush1.msra.mxu0 0.0
      %691 = vmatprep.subr.mxu0 0.0
      %692 = vmatpush1.msra.mxu0 0.0
      %693 = vmatprep.subr.mxu0 0.0
      %694 = vmatpush1.msra.mxu0 0.0
      %695 = vmatprep.subr.mxu0 0.0
      %696 = vmatpush1.msra.mxu0 0.0
      %697 = vmatprep.subr.mxu0 0.0
      %698 = vmatpush1.msra.mxu0 0.0
      %699 = vmatprep.subr.mxu0 0.0
      %700 = vmatpush1.msra.mxu0 0.0
      %701 = vmatprep.subr.mxu0 0.0
      %702 = vmatpush1.msra.mxu0 0.0
      %703 = vmatprep.subr.mxu0 0.0
      %704 = vmatpush1.msra.mxu0 0.0
      %705 = vmatprep.subr.mxu0 0.0
      %706 = vmatpush1.msra.mxu0 0.0
      %707 = vmatprep.subr.mxu0 0.0
      %708 = vmatpush1.msra.mxu0 0.0
      %709 = vmatprep.subr.mxu0 0.0
      %710 = vmatpush1.msra.mxu0 0.0
      %711 = vmatprep.subr.mxu0 0.0
      %712 = vmatpush1.msra.mxu0 0.0
      %713 = vmatprep.subr.mxu0 0.0
      %714 = vmatpush1.msra.mxu0 0.0
      %715 = vmatprep.subr.mxu0 0.0
      %716 = vmatpush1.msra.mxu0 0.0
      %717 = vmatprep.subr.mxu0 0.0
      %718 = vmatpush1.msra.mxu0 0.0
      %719 = vmatprep.subr.mxu0 0.0
      %720 = vmatpush1.msra.mxu0 0.0
      %721 = vmatprep.subr.mxu0 0.0
      %722 = vmatpush1.msra.mxu0 0.0
      %723 = vmatprep.subr.mxu0 0.0
      %724 = vmatpush1.msra.mxu0 0.0
      %725 = vmatprep.subr.mxu0 0.0
      %726 = vmatpush1.msra.mxu0 0.0
      %727 = vmatprep.mubr.f32.mxu0 0.0
      %728 = vmatmul.mubr.f32.gmra.mrb[0].mxu0 %v661
      %v729 = vpop.f32.mrb[0].mxu0
      %v730 = vadd.f32 0.0, %v729
      %v731 = vpop.f32.mrb[0].mxu0
      %732 = vdwg.mxu0
      %v734 = vsel %vm184, %v730, 0
      %736 = vmatprep.subr.mxu0 0.0
      %737 = vmatpush1.msra.mxu0 %v734
      %738 = vmatprep.subr.mxu0 0.0
      %739 = vmatpush1.msra.mxu0 0.0
      %740 = vmatprep.subr.mxu0 0.0
      %741 = vmatpush1.msra.mxu0 0.0
      %742 = vmatprep.subr.mxu0 0.0
      %743 = vmatpush1.msra.mxu0 0.0
      %744 = vmatprep.subr.mxu0 0.0
      %745 = vmatpush1.msra.mxu0 0.0
      %746 = vmatprep.subr.mxu0 0.0
      %747 = vmatpush1.msra.mxu0 0.0
      %748 = vmatprep.subr.mxu0 0.0
      %749 = vmatpush1.msra.mxu0 0.0
      %750 = vmatprep.subr.mxu0 0.0
      %751 = vmatpush1.msra.mxu0 0.0
      %752 = vmatprep.subr.mxu0 0.0
      %753 = vmatpush1.msra.mxu0 0.0
      %754 = vmatprep.subr.mxu0 0.0
      %755 = vmatpush1.msra.mxu0 0.0
      %756 = vmatprep.subr.mxu0 0.0
      %757 = vmatpush1.msra.mxu0 0.0
      %758 = vmatprep.subr.mxu0 0.0
      %759 = vmatpush1.msra.mxu0 0.0
      %760 = vmatprep.subr.mxu0 0.0
      %761 = vmatpush1.msra.mxu0 0.0
      %762 = vmatprep.subr.mxu0 0.0
      %763 = vmatpush1.msra.mxu0 0.0
      %764 = vmatprep.subr.mxu0 0.0
      %765 = vmatpush1.msra.mxu0 0.0
      %766 = vmatprep.subr.mxu0 0.0
      %767 = vmatpush1.msra.mxu0 0.0
      %768 = vmatprep.subr.mxu0 0.0
      %769 = vmatpush1.msra.mxu0 0.0
      %770 = vmatprep.subr.mxu0 0.0
      %771 = vmatpush1.msra.mxu0 0.0
      %772 = vmatprep.subr.mxu0 0.0
      %773 = vmatpush1.msra.mxu0 0.0
      %774 = vmatprep.subr.mxu0 0.0
      %775 = vmatpush1.msra.mxu0 0.0
      %776 = vmatprep.subr.mxu0 0.0
      %777 = vmatpush1.msra.mxu0 0.0
      %778 = vmatprep.subr.mxu0 0.0
      %779 = vmatpush1.msra.mxu0 0.0
      %780 = vmatprep.subr.mxu0 0.0
      %781 = vmatpush1.msra.mxu0 0.0
      %782 = vmatprep.subr.mxu0 0.0
      %783 = vmatpush1.msra.mxu0 0.0
      %784 = vmatprep.subr.mxu0 0.0
      %785 = vmatpush1.msra.mxu0 0.0
      %786 = vmatprep.subr.mxu0 0.0
      %787 = vmatpush1.msra.mxu0 0.0
      %788 = vmatprep.subr.mxu0 0.0
      %789 = vmatpush1.msra.mxu0 0.0
      %790 = vmatprep.subr.mxu0 0.0
      %791 = vmatpush1.msra.mxu0 0.0
      %792 = vmatprep.subr.mxu0 0.0
      %793 = vmatpush1.msra.mxu0 0.0
      %794 = vmatprep.subr.mxu0 0.0
      %795 = vmatpush1.msra.mxu0 0.0
      %796 = vmatprep.subr.mxu0 0.0
      %797 = vmatpush1.msra.mxu0 0.0
      %798 = vmatprep.subr.mxu0 0.0
      %799 = vmatpush1.msra.mxu0 0.0
      %800 = vmatprep.mubr.f32.mxu0 0.0
      %801 = vmatmul.mubr.f32.gmra.mrb[0].mxu0 %v259
      %v802 = vpop.f32.mrb[0].mxu0
      %v803 = vadd.f32 0.0, %v802
      %v804 = vpop.f32.mrb[0].mxu0
      %805 = vmatprep.mubr.f32.mxu0 0.0
      %806 = vmatmul.mubr.f32.gmra.mrb[0].mxu0 %v262
      %v807 = vpop.f32.mrb[0].mxu0
      %v808 = vadd.f32 0.0, %v807
      %v809 = vpop.f32.mrb[0].mxu0
      %810 = vdwg.mxu0
      %s811 = scalar_lea.vmem %s174, 48
      %812 = vst.msk [vmem:[%s811] sm:$0xff] %vm342, %v803
      %813 = vst.msk [vmem:[%s811 + $0x8] sm:$0x1f] %vm344, %v808
      %s814 = scalar_lea.vmem %s167, 8
      %v815 = vld [vmem:[%s814] sm:$0x3]
      %v817 = vsel %vm180, %v815, 0
      %819 = vmatprep.subr.mxu0 0.0
      %820 = vmatpush1.msra.mxu0 %v186
      %821 = vmatprep.subr.mxu0 0.0
      %822 = vmatpush1.msra.mxu0 0.0
      %823 = vmatprep.subr.mxu0 0.0
      %824 = vmatpush1.msra.mxu0 0.0
      %825 = vmatprep.subr.mxu0 0.0
      %826 = vmatpush1.msra.mxu0 0.0
      %827 = vmatprep.subr.mxu0 0.0
      %828 = vmatpush1.msra.mxu0 0.0
      %829 = vmatprep.subr.mxu0 0.0
      %830 = vmatpush1.msra.mxu0 0.0
      %831 = vmatprep.subr.mxu0 0.0
      %832 = vmatpush1.msra.mxu0 0.0
      %833 = vmatprep.subr.mxu0 0.0
      %834 = vmatpush1.msra.mxu0 0.0
      %835 = vmatprep.subr.mxu0 0.0
      %836 = vmatpush1.msra.mxu0 0.0
      %837 = vmatprep.subr.mxu0 0.0
      %838 = vmatpush1.msra.mxu0 0.0
      %839 = vmatprep.subr.mxu0 0.0
      %840 = vmatpush1.msra.mxu0 0.0
      %841 = vmatprep.subr.mxu0 0.0
      %842 = vmatpush1.msra.mxu0 0.0
      %843 = vmatprep.subr.mxu0 0.0
      %844 = vmatpush1.msra.mxu0 0.0
      %845 = vmatprep.subr.mxu0 0.0
      %846 = vmatpush1.msra.mxu0 0.0
      %847 = vmatprep.subr.mxu0 0.0
      %848 = vmatpush1.msra.mxu0 0.0
      %849 = vmatprep.subr.mxu0 0.0
      %850 = vmatpush1.msra.mxu0 0.0
      %851 = vmatprep.subr.mxu0 0.0
      %852 = vmatpush1.msra.mxu0 0.0
      %853 = vmatprep.subr.mxu0 0.0
      %854 = vmatpush1.msra.mxu0 0.0
      %855 = vmatprep.subr.mxu0 0.0
      %856 = vmatpush1.msra.mxu0 0.0
      %857 = vmatprep.subr.mxu0 0.0
      %858 = vmatpush1.msra.mxu0 0.0
      %859 = vmatprep.subr.mxu0 0.0
      %860 = vmatpush1.msra.mxu0 0.0
      %861 = vmatprep.subr.mxu0 0.0
      %862 = vmatpush1.msra.mxu0 0.0
      %863 = vmatprep.subr.mxu0 0.0
      %864 = vmatpush1.msra.mxu0 0.0
      %865 = vmatprep.subr.mxu0 0.0
      %866 = vmatpush1.msra.mxu0 0.0
      %867 = vmatprep.subr.mxu0 0.0
      %868 = vmatpush1.msra.mxu0 0.0
      %869 = vmatprep.subr.mxu0 0.0
      %870 = vmatpush1.msra.mxu0 0.0
      %871 = vmatprep.subr.mxu0 0.0
      %872 = vmatpush1.msra.mxu0 0.0
      %873 = vmatprep.subr.mxu0 0.0
      %874 = vmatpush1.msra.mxu0 0.0
      %875 = vmatprep.subr.mxu0 0.0
      %876 = vmatpush1.msra.mxu0 0.0
      %877 = vmatprep.subr.mxu0 0.0
      %878 = vmatpush1.msra.mxu0 0.0
      %879 = vmatprep.subr.mxu0 0.0
      %880 = vmatpush1.msra.mxu0 0.0
      %881 = vmatprep.subr.mxu0 0.0
      %882 = vmatpush1.msra.mxu0 0.0
      %883 = vmatprep.mubr.f32.mxu0 0.0
      %884 = vmatmul.mubr.f32.gmra.mrb[0].mxu0 %v817
      %v885 = vpop.f32.mrb[0].mxu0
      %v886 = vadd.f32 0.0, %v885
      %v887 = vpop.f32.mrb[0].mxu0
      %888 = vdwg.mxu0
      %v890 = vsel %vm184, %v886, 0
      %892 = vmatprep.subr.mxu0 0.0
      %893 = vmatpush1.msra.mxu0 %v890
      %894 = vmatprep.subr.mxu0 0.0
      %895 = vmatpush1.msra.mxu0 0.0
      %896 = vmatprep.subr.mxu0 0.0
      %897 = vmatpush1.msra.mxu0 0.0
      %898 = vmatprep.subr.mxu0 0.0
      %899 = vmatpush1.msra.mxu0 0.0
      %900 = vmatprep.subr.mxu0 0.0
      %901 = vmatpush1.msra.mxu0 0.0
      %902 = vmatprep.subr.mxu0 0.0
      %903 = vmatpush1.msra.mxu0 0.0
      %904 = vmatprep.subr.mxu0 0.0
      %905 = vmatpush1.msra.mxu0 0.0
      %906 = vmatprep.subr.mxu0 0.0
      %907 = vmatpush1.msra.mxu0 0.0
      %908 = vmatprep.subr.mxu0 0.0
      %909 = vmatpush1.msra.mxu0 0.0
      %910 = vmatprep.subr.mxu0 0.0
      %911 = vmatpush1.msra.mxu0 0.0
      %912 = vmatprep.subr.mxu0 0.0
      %913 = vmatpush1.msra.mxu0 0.0
      %914 = vmatprep.subr.mxu0 0.0
      %915 = vmatpush1.msra.mxu0 0.0
      %916 = vmatprep.subr.mxu0 0.0
      %917 = vmatpush1.msra.mxu0 0.0
      %918 = vmatprep.subr.mxu0 0.0
      %919 = vmatpush1.msra.mxu0 0.0
      %920 = vmatprep.subr.mxu0 0.0
      %921 = vmatpush1.msra.mxu0 0.0
      %922 = vmatprep.subr.mxu0 0.0
      %923 = vmatpush1.msra.mxu0 0.0
      %924 = vmatprep.subr.mxu0 0.0
      %925 = vmatpush1.msra.mxu0 0.0
      %926 = vmatprep.subr.mxu0 0.0
      %927 = vmatpush1.msra.mxu0 0.0
      %928 = vmatprep.subr.mxu0 0.0
      %929 = vmatpush1.msra.mxu0 0.0
      %930 = vmatprep.subr.mxu0 0.0
      %931 = vmatpush1.msra.mxu0 0.0
      %932 = vmatprep.subr.mxu0 0.0
      %933 = vmatpush1.msra.mxu0 0.0
      %934 = vmatprep.subr.mxu0 0.0
      %935 = vmatpush1.msra.mxu0 0.0
      %936 = vmatprep.subr.mxu0 0.0
      %937 = vmatpush1.msra.mxu0 0.0
      %938 = vmatprep.subr.mxu0 0.0
      %939 = vmatpush1.msra.mxu0 0.0
      %940 = vmatprep.subr.mxu0 0.0
      %941 = vmatpush1.msra.mxu0 0.0
      %942 = vmatprep.subr.mxu0 0.0
      %943 = vmatpush1.msra.mxu0 0.0
      %944 = vmatprep.subr.mxu0 0.0
      %945 = vmatpush1.msra.mxu0 0.0
      %946 = vmatprep.subr.mxu0 0.0
      %947 = vmatpush1.msra.mxu0 0.0
      %948 = vmatprep.subr.mxu0 0.0
      %949 = vmatpush1.msra.mxu0 0.0
      %950 = vmatprep.subr.mxu0 0.0
      %951 = vmatpush1.msra.mxu0 0.0
      %952 = vmatprep.subr.mxu0 0.0
      %953 = vmatpush1.msra.mxu0 0.0
      %954 = vmatprep.subr.mxu0 0.0
      %955 = vmatpush1.msra.mxu0 0.0
      %956 = vmatprep.mubr.f32.mxu0 0.0
      %957 = vmatmul.mubr.f32.gmra.mrb[0].mxu0 %v259
      %v958 = vpop.f32.mrb[0].mxu0
      %v959 = vadd.f32 0.0, %v958
      %v960 = vpop.f32.mrb[0].mxu0
      %961 = vmatprep.mubr.f32.mxu0 0.0
      %962 = vmatmul.mubr.f32.gmra.mrb[0].mxu0 %v262
      %v963 = vpop.f32.mrb[0].mxu0
      %v964 = vadd.f32 0.0, %v963
      %v965 = vpop.f32.mrb[0].mxu0
      %966 = vdwg.mxu0
      %s967 = scalar_lea.vmem %s174, 64
      %968 = vst.msk [vmem:[%s967] sm:$0xff] %vm342, %v959
      %969 = vst.msk [vmem:[%s967 + $0x8] sm:$0x1f] %vm344, %v964
      %s970 = smul.u32 5, %s14
      %p971 = scmp.lt.s32.totalorder %s970, 9
      %s972 = scalar_select %p971, %s970, 9
      %s973 = smul.addr %s972, 2
      %s974 = smul.addr %s973, 8
      %s975 = scalar_lea.vmem %s3, %s974
      // Predicated region
      $region33: #{segmenter_forward.5} parent=31 // pred_check
        %p976 = pneg %p100
      $region34: #{segmenter_forward.5} parent=31 // pred_check_branch
        %978 = sbr.rel (%p976) target = $region36
      $region35: #{segmenter_forward.5} parent=31 // pred_region
        %s979 = smul.u32 5, %s14
      $region36: #{segmenter_forward.5} parent=31 // pred_fallthru
        _
    $region32: #{segmenter_forward.5} parent=5 // pred_fallthru
      _
    %p980 = scmp.le.s32.totalorder 2, %s9
    // Predicated region
    $region37: #{segmenter_forward.5} parent=5 // pred_check
      %p981 = pneg %p980
    $region38: #{segmenter_forward.5} parent=5 // pred_check_branch
      %983 = sbr.rel (%p981) target = $region40
    $region39: #{segmenter_forward.5} parent=5 // pred_region
      %s984 = ssub.s32 %s9, 2
      // Predicated region
      $region41: #{segmenter_forward.5} parent=39 // pred_check
        %p985 = pneg %p106
      $region42: #{segmenter_forward.5} parent=39 // pred_check_branch
        %987 = sbr.rel (%p985) target = $region44
      $region43: #{segmenter_forward.5} parent=39 // pred_region
        %s988 = smul.u32 5, %s15
        %p989 = scmp.lt.s32.totalorder %s988, 9
        %s990 = scalar_select %p989, %s988, 9
        %s991 = smul.addr %s990, 2
        %s992 = smul.addr %s991, 8
        %s993 = scalar_lea.vmem %s3, %s992
      $region44: #{segmenter_forward.5} parent=39 // pred_fallthru
        _
    $region40: #{segmenter_forward.5} parent=5 // pred_fallthru
      _
  $region6: #{segmenter_forward.5} parent=0 // loop_footer
    %s13 = sadd.s32 1, %s9
  $region7: #{segmenter_forward.5} parent=0 // loop_footer_branch
    %8 = sbr.rel target = $region3
  $region8: #{segmenter_forward.5} parent=0 // loop_exit
    _

</llo_original>
